<compile_context>
chip_gen: v5e
topology: v5e:2x2
jax: 0.10.0
libtpu: 0.0.40
codegen_flags: <defaults>
</compile_context>

<pallas_src>
import math
from functools import partial

import jax
import jax.numpy as jnp
from jax import lax
from jax.experimental import pallas as pl
from jax.experimental.pallas import tpu as pltpu  # noqa: F401  (kept for TPU-specific tuning hooks)
from jax.scipy.linalg import cho_factor, cho_solve


# ---------------------------------------------------------------------------
# Fused Pallas kernel: Gram matrix + cross-covariance in one launch
# ---------------------------------------------------------------------------

def _rbf_fused_kernel(xt_ref, xs_ref, kxx_ref, kstar_ref, *,
                      outputscale, inv_two_ls2, noise):
    """Emit both RBF covariance blocks from a single read of train_x.

      kxx   = outputscale * exp(-||xi - xj||^2 / (2 ls^2)) + noise * I    (N, N)
      kstar = outputscale * exp(-||x* - xj||^2 / (2 ls^2))                (Ms, N)

    The train-point row norms are computed once and shared by both outputs.
    """
    xt = xt_ref[...]                                                # (N, D)
    xs = xs_ref[...]                                                # (Ms, D)

    tnorm = jnp.sum(xt * xt, axis=-1, keepdims=True)                # (N, 1)  shared

    # Contract on the last axis of both operands: feeds the MXU directly,
    # no materialized transpose of xt.
    dn = (((1,), (1,)), ((), ()))

    # --- Kxx + noise * I -------------------------------------------------
    cross_tt = lax.dot_general(xt, xt, dn,
                               preferred_element_type=jnp.float32)  # (N, N)
    sq_tt = jnp.maximum(tnorm + tnorm.T - 2.0 * cross_tt, 0.0)
    k = outputscale * jnp.exp(-sq_tt * inv_two_ls2)
    n = xt.shape[0]
    row = lax.broadcasted_iota(jnp.int32, (n, n), 0)
    col = lax.broadcasted_iota(jnp.int32, (n, n), 1)
    kxx_ref[...] = k + jnp.where(row == col,
                                 jnp.float32(noise), jnp.float32(0.0))

    # --- K(x*, X) ---------------------------------------------------------
    snorm = jnp.sum(xs * xs, axis=-1, keepdims=True)                # (Ms, 1)
    cross_st = lax.dot_general(xs, xt, dn,
                               preferred_element_type=jnp.float32)  # (Ms, N)
    sq_st = jnp.maximum(snorm + tnorm.T - 2.0 * cross_st, 0.0)
    kstar_ref[...] = outputscale * jnp.exp(-sq_st * inv_two_ls2)


def rbf_kxx_and_kstar(train_x, x_star, *, outputscale, lengthscale, noise):
    """One pallas_call, two outputs. Problem sizes are tiny -> single grid point,
    full-array blocks (block_shape == array shape, so no (8,128) constraint).

    NOTE: if N ever scales to thousands, tile the (N, N) Gram output over a 2-D
    grid (lane-dense 128+-wide blocks, pl.when on diagonal blocks for the noise
    add) to stay inside v7x's 64 MiB VMEM; irrelevant at N=32.
    """
    n, d = train_x.shape
    m, _ = x_star.shape
    kern = partial(_rbf_fused_kernel,
                   outputscale=float(outputscale),
                   inv_two_ls2=float(1.0 / (2.0 * lengthscale * lengthscale)),
                   noise=float(noise))
    return pl.pallas_call(
        kern,
        out_shape=(jax.ShapeDtypeStruct((n, n), jnp.float32),
                   jax.ShapeDtypeStruct((m, n), jnp.float32)),
        in_specs=[pl.BlockSpec((n, d), lambda: (0, 0)),
                  pl.BlockSpec((m, d), lambda: (0, 0))],
        out_specs=(pl.BlockSpec((n, n), lambda: (0, 0)),
                   pl.BlockSpec((m, n), lambda: (0, 0))),
    )(train_x, x_star)


# ---------------------------------------------------------------------------
# Full forward (single jitted graph: kernel -> Cholesky solve -> tiny matmul)
# ---------------------------------------------------------------------------

@jax.jit
def gp_emulator_forward(x_test, train_x, means, stds):
    """Mirrors GPEmulator.forward: {'means': (T,1), 'stds': (T,1)} for x_test[0]."""
    # gpytorch default (untrained) hyperparameters — deterministic in-script init.
    softplus0 = math.log(2.0)
    outputscale = softplus0            # ScaleKernel raw_outputscale = 0
    lengthscale = softplus0            # RBFKernel raw_lengthscale = 0
    noise = softplus0 + 1e-4           # GaussianLikelihood, GreaterThan(1e-4) constraint
    mean_const = 0.0                   # ConstantMean constant = 0

    n, t = means.shape
    targets = jnp.concatenate([means, stds], axis=1).astype(jnp.float32)   # (N, 2T)

    # Only the first test point is consumed by GPEmulator.forward (dist[0]),
    # so slice before the kernel instead of computing all M rows.
    x_star = x_test[:1].astype(jnp.float32)                                # (1, D)

    kxx, kstar = rbf_kxx_and_kstar(
        train_x.astype(jnp.float32), x_star,
        outputscale=outputscale, lengthscale=lengthscale, noise=noise)

    # Kxx + noise*I is SPD -> Cholesky (matches gpytorch's prediction cache).
    # TODO(synk): Cholesky / triangular solve has no clean Pallas TPU primitive; done in plain JAX.
    cf = cho_factor(kxx, lower=True)
    alpha = cho_solve(cf, targets - mean_const)                            # (N, 2T)

    # (1, N) @ (N, 2T) is far too small to justify its own Pallas launch;
    # XLA fuses it with the solve epilogue.
    pred = mean_const + kstar @ alpha                                      # (1, 2T)
    p0 = pred[0]                                                           # (2T,)
    return {"means": p0[:t].reshape(t, 1), "stds": p0[t:].reshape(t, 1)}


# ---------------------------------------------------------------------------
# Pure-JAX reference (for a quiet correctness check)
# ---------------------------------------------------------------------------

def _reference(x_test, train_x, means, stds):
    softplus0 = math.log(2.0)
    outputscale, lengthscale, noise, mean_const = (
        softplus0, softplus0, softplus0 + 1e-4, 0.0)
    n, t = means.shape
    targets = jnp.concatenate([means, stds], axis=1)

    def sqdist(a, b):
        return (jnp.sum(a * a, -1)[:, None] + jnp.sum(b * b, -1)[None, :]
                - 2.0 * a @ b.T)

    kxx = outputscale * jnp.exp(-sqdist(train_x, train_x) / (2 * lengthscale ** 2))
    kxx = kxx + noise * jnp.eye(n, dtype=jnp.float32)
    alpha = jnp.linalg.solve(kxx, targets - mean_const)
    kstar = outputscale * jnp.exp(-sqdist(x_test, train_x) / (2 * lengthscale ** 2))
    pred = mean_const + kstar @ alpha
    p0 = pred[0]
    return {"means": p0[:t].reshape(t, 1), "stds": p0[t:].reshape(t, 1)}


# ---------------------------------------------------------------------------

if __name__ == "__main__":
    key = jax.random.PRNGKey(0)
    k1, k2, k3, k4 = jax.random.split(key, 4)

    N, D, T, M = 32, 4, 8, 2           # train samples, param dims, time stamps, test points
    train_x = jax.random.normal(k1, (N, D), dtype=jnp.float32)       # "parameters"
    means = jax.random.normal(k2, (N, T), dtype=jnp.float32)         # samples['means'][:, time_stamps]
    stds = jax.nn.softplus(jax.random.normal(k3, (N, T), dtype=jnp.float32))
    x_test = jax.random.normal(k4, (M, D), dtype=jnp.float32)

    out = gp_emulator_forward(x_test, train_x, means, stds)
    jax.block_until_ready(out)

    ref = _reference(x_test, train_x, means, stds)
    assert out["means"].shape == (T, 1) and out["stds"].shape == (T, 1)
    assert jnp.allclose(out["means"], ref["means"], atol=1e-4, rtol=1e-4)
    assert jnp.allclose(out["stds"], ref["stds"], atol=1e-4, rtol=1e-4)

    print("KERNEL_OK")
</pallas_src>

<mosaic_0001>
module attributes {stable_mosaic.version = 11 : i64} {
  func.func @_rbf_fused_kernel(%arg0: memref<32x4xf32, #tpu.memory_space<vmem>>, %arg1: memref<1x4xf32, #tpu.memory_space<vmem>>, %arg2: memref<32x32xf32, #tpu.memory_space<vmem>>, %arg3: memref<1x32xf32, #tpu.memory_space<vmem>>) attributes {dimension_semantics = [], scalar_prefetch = 0 : i64, scratch_operands = 0 : i64, tpu.core_type = #tpu.core_type<tc>} {
    %c0 = arith.constant 0 : index
    %c0_0 = arith.constant 0 : index
    %0 = vector.load %arg0[%c0, %c0_0] : memref<32x4xf32, #tpu.memory_space<vmem>>, vector<32x4xf32>
    %c0_1 = arith.constant 0 : index
    %c0_2 = arith.constant 0 : index
    %1 = vector.load %arg1[%c0_1, %c0_2] : memref<1x4xf32, #tpu.memory_space<vmem>>, vector<1x4xf32>
    %2 = arith.mulf %0, %0 : vector<32x4xf32>
    %cst = arith.constant dense<0.000000e+00> : vector<32xf32>
    %3 = vector.multi_reduction <add>, %2, %cst [1] : vector<32x4xf32> to vector<32xf32>
    %4 = vector.shape_cast %3 : vector<32xf32> to vector<32x1xf32>
    %cst_3 = arith.constant dense<0.000000e+00> : vector<32x32xf32>
    %5 = tpu.matmul %0, %0, %cst_3 {dimension_numbers = #tpu.dot_dimension_numbers<[1], [1], [0], [0], [0, 0, 1, 0], [], []>} : vector<32x4xf32>, vector<32x4xf32>, vector<32x32xf32> -> vector<32x32xf32>
    %6 = tpu.transpose %4, [1, 0] : vector<32x1xf32> -> vector<1x32xf32>
    %7 = vector.broadcast %4 : vector<32x1xf32> to vector<32x32xf32>
    %8 = vector.broadcast %6 : vector<1x32xf32> to vector<32x32xf32>
    %9 = arith.addf %7, %8 : vector<32x32xf32>
    %cst_4 = arith.constant 2.000000e+00 : f32
    %10 = vector.broadcast %cst_4 : f32 to vector<32x32xf32>
    %11 = arith.mulf %10, %5 : vector<32x32xf32>
    %12 = arith.subf %9, %11 : vector<32x32xf32>
    %cst_5 = arith.constant 0.000000e+00 : f32
    %13 = vector.broadcast %cst_5 : f32 to vector<32x32xf32>
    %14 = arith.maximumf %12, %13 : vector<32x32xf32>
    %cst_6 = arith.constant 0.000000e+00 : f32
    %15 = vector.broadcast %cst_6 : f32 to vector<32x32xf32>
    %16 = arith.subf %15, %14 : vector<32x32xf32>
    %cst_7 = arith.constant 1.04068446 : f32
    %17 = vector.broadcast %cst_7 : f32 to vector<32x32xf32>
    %18 = arith.mulf %16, %17 : vector<32x32xf32>
    %19 = math.exp %18 : vector<32x32xf32>
    %cst_8 = arith.constant 0.693147182 : f32
    %20 = vector.broadcast %cst_8 : f32 to vector<32x32xf32>
    %21 = arith.mulf %20, %19 : vector<32x32xf32>
    %22 = tpu.iota {dimensions = array<i32: 0>} : vector<32x32xi32>
    %23 = tpu.iota {dimensions = array<i32: 1>} : vector<32x32xi32>
    %24 = arith.cmpi eq, %22, %23 : vector<32x32xi32>
    %cst_9 = arith.constant 0.693247199 : f32
    %cst_10 = arith.constant 0.000000e+00 : f32
    %25 = vector.broadcast %cst_9 : f32 to vector<32x32xf32>
    %26 = vector.broadcast %cst_10 : f32 to vector<32x32xf32>
    %27 = arith.select %24, %25, %26 : vector<32x32xi1>, vector<32x32xf32>
    %28 = arith.addf %21, %27 : vector<32x32xf32>
    %c0_11 = arith.constant 0 : index
    %c0_12 = arith.constant 0 : index
    %29 = vector.load %arg2[%c0_11, %c0_12] : memref<32x32xf32, #tpu.memory_space<vmem>>, vector<32x32xf32>
    tpu.vector_store %arg2[%c0_11, %c0_12], %28 {strides = array<i32>} : memref<32x32xf32, #tpu.memory_space<vmem>>, vector<32x32xf32>,
    %30 = arith.mulf %1, %1 : vector<1x4xf32>
    %cst_13 = arith.constant dense<0.000000e+00> : vector<1xf32>
    %31 = vector.multi_reduction <add>, %30, %cst_13 [1] : vector<1x4xf32> to vector<1xf32>
    %32 = vector.shape_cast %31 : vector<1xf32> to vector<1x1xf32>
    %cst_14 = arith.constant dense<0.000000e+00> : vector<1x32xf32>
    %33 = tpu.matmul %1, %0, %cst_14 {dimension_numbers = #tpu.dot_dimension_numbers<[1], [1], [0], [0], [0, 0, 1, 0], [], []>} : vector<1x4xf32>, vector<32x4xf32>, vector<1x32xf32> -> vector<1x32xf32>
    %34 = tpu.transpose %4, [1, 0] : vector<32x1xf32> -> vector<1x32xf32>
    %35 = vector.broadcast %32 : vector<1x1xf32> to vector<1x32xf32>
    %36 = arith.addf %35, %34 : vector<1x32xf32>
    %cst_15 = arith.constant 2.000000e+00 : f32
    %37 = vector.broadcast %cst_15 : f32 to vector<1x32xf32>
    %38 = arith.mulf %37, %33 : vector<1x32xf32>
    %39 = arith.subf %36, %38 : vector<1x32xf32>
    %cst_16 = arith.constant 0.000000e+00 : f32
    %40 = vector.broadcast %cst_16 : f32 to vector<1x32xf32>
    %41 = arith.maximumf %39, %40 : vector<1x32xf32>
    %cst_17 = arith.constant 0.000000e+00 : f32
    %42 = vector.broadcast %cst_17 : f32 to vector<1x32xf32>
    %43 = arith.subf %42, %41 : vector<1x32xf32>
    %cst_18 = arith.constant 1.04068446 : f32
    %44 = vector.broadcast %cst_18 : f32 to vector<1x32xf32>
    %45 = arith.mulf %43, %44 : vector<1x32xf32>
    %46 = math.exp %45 : vector<1x32xf32>
    %cst_19 = arith.constant 0.693147182 : f32
    %47 = vector.broadcast %cst_19 : f32 to vector<1x32xf32>
    %48 = arith.mulf %47, %46 : vector<1x32xf32>
    %c0_20 = arith.constant 0 : index
    %c0_21 = arith.constant 0 : index
    %49 = vector.load %arg3[%c0_20, %c0_21] : memref<1x32xf32, #tpu.memory_space<vmem>>, vector<1x32xf32>
    tpu.vector_store %arg3[%c0_20, %c0_21], %48 {strides = array<i32>} : memref<1x32xf32, #tpu.memory_space<vmem>>, vector<1x32xf32>,
    return
  }
}

</mosaic_0001>

<llo_original>
// kernel: custom-call.6
$region0: #{custom-call.6}
  %s0 = inlined_call_operand.vmem [shape: f32[32,32], index: 0, kind: input, shape index: {}]
  %s1 = inlined_call_operand.vmem [shape: f32[32,32], index: 1, kind: output, shape index: {}]
  $region1: #{custom-call.6} parent=0
    #allocation0 [shape = 'u8[16384]{0}', space=vmem, size = 0x4000, scoped, tag = 'operand span for operand 0']
    #allocation1 [shape = 'u8[16384]{0}', space=vmem, size = 0x4000, scoped, tag = 'operand span for operand 1']
    // Predicated region
    $region2: #{custom-call.6} parent=1 // pred_check
      _
    $region3: #{custom-call.6} parent=1 // pred_check_branch
      %3 = sbr.rel (0) target = $region5
    $region4: #{custom-call.6} parent=1 // pred_region
      // Predicated region
      $region6: #{custom-call.6} parent=4 // pred_check
        _
      $region7: #{custom-call.6} parent=4 // pred_check_branch
        %5 = sbr.rel (0) target = $region9
      $region8: #{custom-call.6} parent=4 // pred_region
        // Predicated region
        $region21: #{custom-call.6} parent=8 // pred_check
          _
        $region22: #{custom-call.6} parent=8 // pred_check_branch
          %27 = sbr.rel (0) target = $region24
        $region23: #{custom-call.6} parent=8 // pred_region
          loop: start=0, step=1, limit=1
          $region25: #{custom-call.6} parent=23 // loop_pre_header
            _
          $region26: #{custom-call.6} parent=23 // loop_header
            %s29 = sphi 0, %s33
            %p30 = scmp.ge.s32.totalorder %s29, 1
            %s34 = sphi %s0, %s0
            %s35 = sphi [#allocation0], [#allocation0]
          $region27: #{custom-call.6} parent=23 // loop_header_branch
            %32 = sbr.rel (%p30) target = $region31
          $region28: #{custom-call.6} parent=23 // loop_body
            %v36 = vld [vmem:[%s34] sm:$0xff]
            %37 = vst [vmem:[%s35] sm:$0xff] %v36
            %v38 = vld [vmem:[%s34 + $0x8] sm:$0xff]
            %39 = vst [vmem:[%s35 + $0x8] sm:$0xff] %v38
            %v40 = vld [vmem:[%s34 + $0x10] sm:$0xff]
            %41 = vst [vmem:[%s35 + $0x10] sm:$0xff] %v40
            %v42 = vld [vmem:[%s34 + $0x18] sm:$0xff]
            %43 = vst [vmem:[%s35 + $0x18] sm:$0xff] %v42
          $region29: #{custom-call.6} parent=23 // loop_footer
            %s33 = sadd.s32 1, %s29
          $region30: #{custom-call.6} parent=23 // loop_footer_branch
            %28 = sbr.rel target = $region26
          $region31: #{custom-call.6} parent=23 // loop_exit
            _
        $region24: #{custom-call.6} parent=8 // pred_fallthru
          _
        // Predicated region
        $region32: #{custom-call.6} parent=8 // pred_check
          _
        $region33: #{custom-call.6} parent=8 // pred_check_branch
          %45 = sbr.rel target = $region35
        $region34: #{custom-call.6} parent=8 // pred_region
          _
        $region35: #{custom-call.6} parent=8 // pred_fallthru
          _
      $region9: #{custom-call.6} parent=4 // pred_fallthru
        _
      // Predicated region
      $region10: #{custom-call.6} parent=4 // pred_check
        _
      $region11: #{custom-call.6} parent=4 // pred_check_branch
        %7 = sbr.rel target = $region13
      $region12: #{custom-call.6} parent=4 // pred_region
        %s9 = ssub.s32 256, 1
        loop: start=0, step=1, limit=1
        $region14: #{custom-call.6} parent=12 // loop_pre_header
          _
        $region15: #{custom-call.6} parent=12 // loop_header
          %s11 = sphi 0, %s15
          %p12 = scmp.ge.s32.totalorder %s11, 1
          %s16 = sphi %s0, %s0
          %s17 = sphi [#allocation0], [#allocation0]
        $region16: #{custom-call.6} parent=12 // loop_header_branch
          %14 = sbr.rel (%p12) target = $region20
        $region17: #{custom-call.6} parent=12 // loop_body
          %v18 = vld [vmem:[%s16] sm:%s9]
          %19 = vst [vmem:[%s17] sm:%s9] %v18
          %v20 = vld [vmem:[%s16 + $0x8] sm:%s9]
          %21 = vst [vmem:[%s17 + $0x8] sm:%s9] %v20
          %v22 = vld [vmem:[%s16 + $0x10] sm:%s9]
          %23 = vst [vmem:[%s17 + $0x10] sm:%s9] %v22
          %v24 = vld [vmem:[%s16 + $0x18] sm:%s9]
          %25 = vst [vmem:[%s17 + $0x18] sm:%s9] %v24
        $region18: #{custom-call.6} parent=12 // loop_footer
          %s15 = sadd.s32 1, %s11
        $region19: #{custom-call.6} parent=12 // loop_footer_branch
          %10 = sbr.rel target = $region15
        $region20: #{custom-call.6} parent=12 // loop_exit
          _
      $region13: #{custom-call.6} parent=4 // pred_fallthru
        _
    $region5: #{custom-call.6} parent=1 // pred_fallthru
      _
    %46 = vnop
    %47 = vst [vmem:[#allocation1] sm:$0xff] 0.0
    %s48 = scalar_lea.vmem [#allocation1], 8
    %49 = vst [vmem:[%s48] sm:$0xff] 0.0
    %s50 = scalar_lea.vmem [#allocation1], 16
    %51 = vst [vmem:[%s50] sm:$0xff] 0.0
    %s52 = scalar_lea.vmem [#allocation1], 24
    %53 = vst [vmem:[%s52] sm:$0xff] 0.0
    %vm54 = vcmask 7168
    %v55 = vld [vmem:[#allocation1] ss:$0 sm:$0xff]
    %v56 = vld [vmem:[#allocation0] ss:$0 sm:$0xff]
    %v57 = vmul.f32 %v55, %v55
    %58 = vadd.xlane.f32.xlu0 %v57
    %v59 = vpop.xlane.xlu0 %58
    %v60 = vsub.f32 %v56, %v59
    %v61 = vrsqrt.pop %v60
    %v62 = vmul.f32 %v61, %v60
    %v63 = vmul.f32 %v62, %v61
    %v64 = vmul.f32 0.5, %v63
    %v65 = vsub.f32 1.5, %v64
    %v66 = vmul.f32 %v61, %v65
    %vm67 = vweird.f32 %v60
    %vm68 = vweird.f32 %v61
    %vm69 = vmor %vm67, %vm68
    %v70 = vsel %vm69, %v61, %v66
    %v71 = vld [vmem:[#allocation0] sm:$0xff]
    %v72 = vld [vmem:[#allocation1] sm:$0xff]
    %v73 = vmul.f32 %v72, %v55
    %74 = vadd.xlane.f32.xlu0 %v73
    %v75 = vpop.xlane.xlu0 %74
    %v76 = vsub.f32 %v71, %v75
    %v77 = vmul.f32 %v76, %v70
    %v78 = vsel %vm54, %v77, 0.0
    %v79 = vadd.f32 %v72, %v78
    %80 = vst [vmem:[#allocation1] sm:$0xff] %v79
    %s81 = scalar_lea.vmem [#allocation0], 8
    %v82 = vld [vmem:[%s81] sm:$0xff]
    %s83 = scalar_lea.vmem [#allocation1], 8
    %v84 = vld [vmem:[%s83] sm:$0xff]
    %v85 = vmul.f32 %v84, %v55
    %86 = vadd.xlane.f32.xlu0 %v85
    %v87 = vpop.xlane.xlu0 %86
    %v88 = vsub.f32 %v82, %v87
    %v89 = vmul.f32 %v88, %v70
    %v90 = vsel %vm54, %v89, 0.0
    %v91 = vadd.f32 %v84, %v90
    %s92 = scalar_lea.vmem [#allocation1], 8
    %93 = vst [vmem:[%s92] sm:$0xff] %v91
    %s94 = scalar_lea.vmem [#allocation0], 16
    %v95 = vld [vmem:[%s94] sm:$0xff]
    %s96 = scalar_lea.vmem [#allocation1], 16
    %v97 = vld [vmem:[%s96] sm:$0xff]
    %v98 = vmul.f32 %v97, %v55
    %99 = vadd.xlane.f32.xlu0 %v98
    %v100 = vpop.xlane.xlu0 %99
    %v101 = vsub.f32 %v95, %v100
    %v102 = vmul.f32 %v101, %v70
    %v103 = vsel %vm54, %v102, 0.0
    %v104 = vadd.f32 %v97, %v103
    %s105 = scalar_lea.vmem [#allocation1], 16
    %106 = vst [vmem:[%s105] sm:$0xff] %v104
    %s107 = scalar_lea.vmem [#allocation0], 24
    %v108 = vld [vmem:[%s107] sm:$0xff]
    %s109 = scalar_lea.vmem [#allocation1], 24
    %v110 = vld [vmem:[%s109] sm:$0xff]
    %v111 = vmul.f32 %v110, %v55
    %112 = vadd.xlane.f32.xlu0 %v111
    %v113 = vpop.xlane.xlu0 %112
    %v114 = vsub.f32 %v108, %v113
    %v115 = vmul.f32 %v114, %v70
    %v116 = vsel %vm54, %v115, 0.0
    %v117 = vadd.f32 %v110, %v116
    %s118 = scalar_lea.vmem [#allocation1], 24
    %119 = vst [vmem:[%s118] sm:$0xff] %v117
    %vm120 = vcmask 15368
    %s121 = scalar_lea.vmem [#allocation1], 1
    %v122 = vld [vmem:[%s121] ss:$0 sm:$0xff]
    %s123 = scalar_lea.vmem [#allocation0], 1
    %v124 = vld [vmem:[%s123] ss:$0 sm:$0xff]
    %v125 = vmul.f32 %v122, %v122
    %126 = vadd.xlane.f32.xlu0 %v125
    %v127 = vpop.xlane.xlu0 %126
    %v128 = vsub.f32 %v124, %v127
    %v129 = vrsqrt.pop %v128
    %v130 = vmul.f32 %v129, %v128
    %v131 = vmul.f32 %v130, %v129
    %v132 = vmul.f32 0.5, %v131
    %v133 = vsub.f32 1.5, %v132
    %v134 = vmul.f32 %v129, %v133
    %vm135 = vweird.f32 %v128
    %vm136 = vweird.f32 %v129
    %vm137 = vmor %vm135, %vm136
    %v138 = vsel %vm137, %v129, %v134
    %v139 = vld [vmem:[#allocation0] sm:$0xff]
    %v140 = vld [vmem:[#allocation1] sm:$0xff]
    %v141 = vmul.f32 %v140, %v122
    %142 = vadd.xlane.f32.xlu0 %v141
    %v143 = vpop.xlane.xlu0 %142
    %v144 = vsub.f32 %v139, %v143
    %v145 = vmul.f32 %v144, %v138
    %vm146 = vcmask 1047553
    %vm147 = vmand %vm120, %vm146
    %v148 = vsel %vm147, %v145, 0.0
    %v149 = vadd.f32 %v140, %v148
    %150 = vst [vmem:[#allocation1] sm:$0xff] %v149
    %s151 = scalar_lea.vmem [#allocation0], 8
    %v152 = vld [vmem:[%s151] sm:$0xff]
    %s153 = scalar_lea.vmem [#allocation1], 8
    %v154 = vld [vmem:[%s153] sm:$0xff]
    %v155 = vmul.f32 %v154, %v122
    %156 = vadd.xlane.f32.xlu0 %v155
    %v157 = vpop.xlane.xlu0 %156
    %v158 = vsub.f32 %v152, %v157
    %v159 = vmul.f32 %v158, %v138
    %v160 = vsel %vm120, %v159, 0.0
    %v161 = vadd.f32 %v154, %v160
    %s162 = scalar_lea.vmem [#allocation1], 8
    %163 = vst [vmem:[%s162] sm:$0xff] %v161
    %s164 = scalar_lea.vmem [#allocation0], 16
    %v165 = vld [vmem:[%s164] sm:$0xff]
    %s166 = scalar_lea.vmem [#allocation1], 16
    %v167 = vld [vmem:[%s166] sm:$0xff]
    %v168 = vmul.f32 %v167, %v122
    %169 = vadd.xlane.f32.xlu0 %v168
    %v170 = vpop.xlane.xlu0 %169
    %v171 = vsub.f32 %v165, %v170
    %v172 = vmul.f32 %v171, %v138
    %v173 = vsel %vm120, %v172, 0.0
    %v174 = vadd.f32 %v167, %v173
    %s175 = scalar_lea.vmem [#allocation1], 16
    %176 = vst [vmem:[%s175] sm:$0xff] %v174
    %s177 = scalar_lea.vmem [#allocation0], 24
    %v178 = vld [vmem:[%s177] sm:$0xff]
    %s179 = scalar_lea.vmem [#allocation1], 24
    %v180 = vld [vmem:[%s179] sm:$0xff]
    %v181 = vmul.f32 %v180, %v122
    %182 = vadd.xlane.f32.xlu0 %v181
    %v183 = vpop.xlane.xlu0 %182
    %v184 = vsub.f32 %v178, %v183
    %v185 = vmul.f32 %v184, %v138
    %v186 = vsel %vm120, %v185, 0.0
    %v187 = vadd.f32 %v180, %v186
    %s188 = scalar_lea.vmem [#allocation1], 24
    %189 = vst [vmem:[%s188] sm:$0xff] %v187
    %vm190 = vcmask 23568
    %s191 = scalar_lea.vmem [#allocation1], 2
    %v192 = vld [vmem:[%s191] ss:$0 sm:$0xff]
    %s193 = scalar_lea.vmem [#allocation0], 2
    %v194 = vld [vmem:[%s193] ss:$0 sm:$0xff]
    %v195 = vmul.f32 %v192, %v192
    %196 = vadd.xlane.f32.xlu0 %v195
    %v197 = vpop.xlane.xlu0 %196
    %v198 = vsub.f32 %v194, %v197
    %v199 = vrsqrt.pop %v198
    %v200 = vmul.f32 %v199, %v198
    %v201 = vmul.f32 %v200, %v199
    %v202 = vmul.f32 0.5, %v201
    %v203 = vsub.f32 1.5, %v202
    %v204 = vmul.f32 %v199, %v203
    %vm205 = vweird.f32 %v198
    %vm206 = vweird.f32 %v199
    %vm207 = vmor %vm205, %vm206
    %v208 = vsel %vm207, %v199, %v204
    %v209 = vld [vmem:[#allocation0] sm:$0xff]
    %v210 = vld [vmem:[#allocation1] sm:$0xff]
    %v211 = vmul.f32 %v210, %v192
    %212 = vadd.xlane.f32.xlu0 %v211
    %v213 = vpop.xlane.xlu0 %212
    %v214 = vsub.f32 %v209, %v213
    %v215 = vmul.f32 %v214, %v208
    %vm216 = vcmask 1047554
    %vm217 = vmand %vm190, %vm216
    %v218 = vsel %vm217, %v215, 0.0
    %v219 = vadd.f32 %v210, %v218
    %220 = vst [vmem:[#allocation1] sm:$0xff] %v219
    %s221 = scalar_lea.vmem [#allocation0], 8
    %v222 = vld [vmem:[%s221] sm:$0xff]
    %s223 = scalar_lea.vmem [#allocation1], 8
    %v224 = vld [vmem:[%s223] sm:$0xff]
    %v225 = vmul.f32 %v224, %v192
    %226 = vadd.xlane.f32.xlu0 %v225
    %v227 = vpop.xlane.xlu0 %226
    %v228 = vsub.f32 %v222, %v227
    %v229 = vmul.f32 %v228, %v208
    %v230 = vsel %vm190, %v229, 0.0
    %v231 = vadd.f32 %v224, %v230
    %s232 = scalar_lea.vmem [#allocation1], 8
    %233 = vst [vmem:[%s232] sm:$0xff] %v231
    %s234 = scalar_lea.vmem [#allocation0], 16
    %v235 = vld [vmem:[%s234] sm:$0xff]
    %s236 = scalar_lea.vmem [#allocation1], 16
    %v237 = vld [vmem:[%s236] sm:$0xff]
    %v238 = vmul.f32 %v237, %v192
    %239 = vadd.xlane.f32.xlu0 %v238
    %v240 = vpop.xlane.xlu0 %239
    %v241 = vsub.f32 %v235, %v240
    %v242 = vmul.f32 %v241, %v208
    %v243 = vsel %vm190, %v242, 0.0
    %v244 = vadd.f32 %v237, %v243
    %s245 = scalar_lea.vmem [#allocation1], 16
    %246 = vst [vmem:[%s245] sm:$0xff] %v244
    %s247 = scalar_lea.vmem [#allocation0], 24
    %v248 = vld [vmem:[%s247] sm:$0xff]
    %s249 = scalar_lea.vmem [#allocation1], 24
    %v250 = vld [vmem:[%s249] sm:$0xff]
    %v251 = vmul.f32 %v250, %v192
    %252 = vadd.xlane.f32.xlu0 %v251
    %v253 = vpop.xlane.xlu0 %252
    %v254 = vsub.f32 %v248, %v253
    %v255 = vmul.f32 %v254, %v208
    %v256 = vsel %vm190, %v255, 0.0
    %v257 = vadd.f32 %v250, %v256
    %s258 = scalar_lea.vmem [#allocation1], 24
    %259 = vst [vmem:[%s258] sm:$0xff] %v257
    %vm260 = vcmask 31768
    %s261 = scalar_lea.vmem [#allocation1], 3
    %v262 = vld [vmem:[%s261] ss:$0 sm:$0xff]
    %s263 = scalar_lea.vmem [#allocation0], 3
    %v264 = vld [vmem:[%s263] ss:$0 sm:$0xff]
    %v265 = vmul.f32 %v262, %v262
    %266 = vadd.xlane.f32.xlu0 %v265
    %v267 = vpop.xlane.xlu0 %266
    %v268 = vsub.f32 %v264, %v267
    %v269 = vrsqrt.pop %v268
    %v270 = vmul.f32 %v269, %v268
    %v271 = vmul.f32 %v270, %v269
    %v272 = vmul.f32 0.5, %v271
    %v273 = vsub.f32 1.5, %v272
    %v274 = vmul.f32 %v269, %v273
    %vm275 = vweird.f32 %v268
    %vm276 = vweird.f32 %v269
    %vm277 = vmor %vm275, %vm276
    %v278 = vsel %vm277, %v269, %v274
    %v279 = vld [vmem:[#allocation0] sm:$0xff]
    %v280 = vld [vmem:[#allocation1] sm:$0xff]
    %v281 = vmul.f32 %v280, %v262
    %282 = vadd.xlane.f32.xlu0 %v281
    %v283 = vpop.xlane.xlu0 %282
    %v284 = vsub.f32 %v279, %v283
    %v285 = vmul.f32 %v284, %v278
    %vm286 = vcmask 1047555
    %vm287 = vmand %vm260, %vm286
    %v288 = vsel %vm287, %v285, 0.0
    %v289 = vadd.f32 %v280, %v288
    %290 = vst [vmem:[#allocation1] sm:$0xff] %v289
    %s291 = scalar_lea.vmem [#allocation0], 8
    %v292 = vld [vmem:[%s291] sm:$0xff]
    %s293 = scalar_lea.vmem [#allocation1], 8
    %v294 = vld [vmem:[%s293] sm:$0xff]
    %v295 = vmul.f32 %v294, %v262
    %296 = vadd.xlane.f32.xlu0 %v295
    %v297 = vpop.xlane.xlu0 %296
    %v298 = vsub.f32 %v292, %v297
    %v299 = vmul.f32 %v298, %v278
    %v300 = vsel %vm260, %v299, 0.0
    %v301 = vadd.f32 %v294, %v300
    %s302 = scalar_lea.vmem [#allocation1], 8
    %303 = vst [vmem:[%s302] sm:$0xff] %v301
    %s304 = scalar_lea.vmem [#allocation0], 16
    %v305 = vld [vmem:[%s304] sm:$0xff]
    %s306 = scalar_lea.vmem [#allocation1], 16
    %v307 = vld [vmem:[%s306] sm:$0xff]
    %v308 = vmul.f32 %v307, %v262
    %309 = vadd.xlane.f32.xlu0 %v308
    %v310 = vpop.xlane.xlu0 %309
    %v311 = vsub.f32 %v305, %v310
    %v312 = vmul.f32 %v311, %v278
    %v313 = vsel %vm260, %v312, 0.0
    %v314 = vadd.f32 %v307, %v313
    %s315 = scalar_lea.vmem [#allocation1], 16
    %316 = vst [vmem:[%s315] sm:$0xff] %v314
    %s317 = scalar_lea.vmem [#allocation0], 24
    %v318 = vld [vmem:[%s317] sm:$0xff]
    %s319 = scalar_lea.vmem [#allocation1], 24
    %v320 = vld [vmem:[%s319] sm:$0xff]
    %v321 = vmul.f32 %v320, %v262
    %322 = vadd.xlane.f32.xlu0 %v321
    %v323 = vpop.xlane.xlu0 %322
    %v324 = vsub.f32 %v318, %v323
    %v325 = vmul.f32 %v324, %v278
    %v326 = vsel %vm260, %v325, 0.0
    %v327 = vadd.f32 %v320, %v326
    %s328 = scalar_lea.vmem [#allocation1], 24
    %329 = vst [vmem:[%s328] sm:$0xff] %v327
    %vm330 = vcmask 39968
    %s331 = scalar_lea.vmem [#allocation1], 4
    %v332 = vld [vmem:[%s331] ss:$0 sm:$0xff]
    %s333 = scalar_lea.vmem [#allocation0], 4
    %v334 = vld [vmem:[%s333] ss:$0 sm:$0xff]
    %v335 = vmul.f32 %v332, %v332
    %336 = vadd.xlane.f32.xlu0 %v335
    %v337 = vpop.xlane.xlu0 %336
    %v338 = vsub.f32 %v334, %v337
    %v339 = vrsqrt.pop %v338
    %v340 = vmul.f32 %v339, %v338
    %v341 = vmul.f32 %v340, %v339
    %v342 = vmul.f32 0.5, %v341
    %v343 = vsub.f32 1.5, %v342
    %v344 = vmul.f32 %v339, %v343
    %vm345 = vweird.f32 %v338
    %vm346 = vweird.f32 %v339
    %vm347 = vmor %vm345, %vm346
    %v348 = vsel %vm347, %v339, %v344
    %v349 = vld [vmem:[#allocation0] sm:$0xff]
    %v350 = vld [vmem:[#allocation1] sm:$0xff]
    %v351 = vmul.f32 %v350, %v332
    %352 = vadd.xlane.f32.xlu0 %v351
    %v353 = vpop.xlane.xlu0 %352
    %v354 = vsub.f32 %v349, %v353
    %v355 = vmul.f32 %v354, %v348
    %vm356 = vcmask 1047556
    %vm357 = vmand %vm330, %vm356
    %v358 = vsel %vm357, %v355, 0.0
    %v359 = vadd.f32 %v350, %v358
    %360 = vst [vmem:[#allocation1] sm:$0xff] %v359
    %s361 = scalar_lea.vmem [#allocation0], 8
    %v362 = vld [vmem:[%s361] sm:$0xff]
    %s363 = scalar_lea.vmem [#allocation1], 8
    %v364 = vld [vmem:[%s363] sm:$0xff]
    %v365 = vmul.f32 %v364, %v332
    %366 = vadd.xlane.f32.xlu0 %v365
    %v367 = vpop.xlane.xlu0 %366
    %v368 = vsub.f32 %v362, %v367
    %v369 = vmul.f32 %v368, %v348
    %v370 = vsel %vm330, %v369, 0.0
    %v371 = vadd.f32 %v364, %v370
    %s372 = scalar_lea.vmem [#allocation1], 8
    %373 = vst [vmem:[%s372] sm:$0xff] %v371
    %s374 = scalar_lea.vmem [#allocation0], 16
    %v375 = vld [vmem:[%s374] sm:$0xff]
    %s376 = scalar_lea.vmem [#allocation1], 16
    %v377 = vld [vmem:[%s376] sm:$0xff]
    %v378 = vmul.f32 %v377, %v332
    %379 = vadd.xlane.f32.xlu0 %v378
    %v380 = vpop.xlane.xlu0 %379
    %v381 = vsub.f32 %v375, %v380
    %v382 = vmul.f32 %v381, %v348
    %v383 = vsel %vm330, %v382, 0.0
    %v384 = vadd.f32 %v377, %v383
    %s385 = scalar_lea.vmem [#allocation1], 16
    %386 = vst [vmem:[%s385] sm:$0xff] %v384
    %s387 = scalar_lea.vmem [#allocation0], 24
    %v388 = vld [vmem:[%s387] sm:$0xff]
    %s389 = scalar_lea.vmem [#allocation1], 24
    %v390 = vld [vmem:[%s389] sm:$0xff]
    %v391 = vmul.f32 %v390, %v332
    %392 = vadd.xlane.f32.xlu0 %v391
    %v393 = vpop.xlane.xlu0 %392
    %v394 = vsub.f32 %v388, %v393
    %v395 = vmul.f32 %v394, %v348
    %v396 = vsel %vm330, %v395, 0.0
    %v397 = vadd.f32 %v390, %v396
    %s398 = scalar_lea.vmem [#allocation1], 24
    %399 = vst [vmem:[%s398] sm:$0xff] %v397
    %vm400 = vcmask 48168
    %s401 = scalar_lea.vmem [#allocation1], 5
    %v402 = vld [vmem:[%s401] ss:$0 sm:$0xff]
    %s403 = scalar_lea.vmem [#allocation0], 5
    %v404 = vld [vmem:[%s403] ss:$0 sm:$0xff]
    %v405 = vmul.f32 %v402, %v402
    %406 = vadd.xlane.f32.xlu0 %v405
    %v407 = vpop.xlane.xlu0 %406
    %v408 = vsub.f32 %v404, %v407
    %v409 = vrsqrt.pop %v408
    %v410 = vmul.f32 %v409, %v408
    %v411 = vmul.f32 %v410, %v409
    %v412 = vmul.f32 0.5, %v411
    %v413 = vsub.f32 1.5, %v412
    %v414 = vmul.f32 %v409, %v413
    %vm415 = vweird.f32 %v408
    %vm416 = vweird.f32 %v409
    %vm417 = vmor %vm415, %vm416
    %v418 = vsel %vm417, %v409, %v414
    %v419 = vld [vmem:[#allocation0] sm:$0xff]
    %v420 = vld [vmem:[#allocation1] sm:$0xff]
    %v421 = vmul.f32 %v420, %v402
    %422 = vadd.xlane.f32.xlu0 %v421
    %v423 = vpop.xlane.xlu0 %422
    %v424 = vsub.f32 %v419, %v423
    %v425 = vmul.f32 %v424, %v418
    %vm426 = vcmask 1047557
    %vm427 = vmand %vm400, %vm426
    %v428 = vsel %vm427, %v425, 0.0
    %v429 = vadd.f32 %v420, %v428
    %430 = vst [vmem:[#allocation1] sm:$0xff] %v429
    %s431 = scalar_lea.vmem [#allocation0], 8
    %v432 = vld [vmem:[%s431] sm:$0xff]
    %s433 = scalar_lea.vmem [#allocation1], 8
    %v434 = vld [vmem:[%s433] sm:$0xff]
    %v435 = vmul.f32 %v434, %v402
    %436 = vadd.xlane.f32.xlu0 %v435
    %v437 = vpop.xlane.xlu0 %436
    %v438 = vsub.f32 %v432, %v437
    %v439 = vmul.f32 %v438, %v418
    %v440 = vsel %vm400, %v439, 0.0
    %v441 = vadd.f32 %v434, %v440
    %s442 = scalar_lea.vmem [#allocation1], 8
    %443 = vst [vmem:[%s442] sm:$0xff] %v441
    %s444 = scalar_lea.vmem [#allocation0], 16
    %v445 = vld [vmem:[%s444] sm:$0xff]
    %s446 = scalar_lea.vmem [#allocation1], 16
    %v447 = vld [vmem:[%s446] sm:$0xff]
    %v448 = vmul.f32 %v447, %v402
    %449 = vadd.xlane.f32.xlu0 %v448
    %v450 = vpop.xlane.xlu0 %449
    %v451 = vsub.f32 %v445, %v450
    %v452 = vmul.f32 %v451, %v418
    %v453 = vsel %vm400, %v452, 0.0
    %v454 = vadd.f32 %v447, %v453
    %s455 = scalar_lea.vmem [#allocation1], 16
    %456 = vst [vmem:[%s455] sm:$0xff] %v454
    %s457 = scalar_lea.vmem [#allocation0], 24
    %v458 = vld [vmem:[%s457] sm:$0xff]
    %s459 = scalar_lea.vmem [#allocation1], 24
    %v460 = vld [vmem:[%s459] sm:$0xff]
    %v461 = vmul.f32 %v460, %v402
    %462 = vadd.xlane.f32.xlu0 %v461
    %v463 = vpop.xlane.xlu0 %462
    %v464 = vsub.f32 %v458, %v463
    %v465 = vmul.f32 %v464, %v418
    %v466 = vsel %vm400, %v465, 0.0
    %v467 = vadd.f32 %v460, %v466
    %s468 = scalar_lea.vmem [#allocation1], 24
    %469 = vst [vmem:[%s468] sm:$0xff] %v467
    %vm470 = vcmask 56368
    %s471 = scalar_lea.vmem [#allocation1], 6
    %v472 = vld [vmem:[%s471] ss:$0 sm:$0xff]
    %s473 = scalar_lea.vmem [#allocation0], 6
    %v474 = vld [vmem:[%s473] ss:$0 sm:$0xff]
    %v475 = vmul.f32 %v472, %v472
    %476 = vadd.xlane.f32.xlu0 %v475
    %v477 = vpop.xlane.xlu0 %476
    %v478 = vsub.f32 %v474, %v477
    %v479 = vrsqrt.pop %v478
    %v480 = vmul.f32 %v479, %v478
    %v481 = vmul.f32 %v480, %v479
    %v482 = vmul.f32 0.5, %v481
    %v483 = vsub.f32 1.5, %v482
    %v484 = vmul.f32 %v479, %v483
    %vm485 = vweird.f32 %v478
    %vm486 = vweird.f32 %v479
    %vm487 = vmor %vm485, %vm486
    %v488 = vsel %vm487, %v479, %v484
    %v489 = vld [vmem:[#allocation0] sm:$0xff]
    %v490 = vld [vmem:[#allocation1] sm:$0xff]
    %v491 = vmul.f32 %v490, %v472
    %492 = vadd.xlane.f32.xlu0 %v491
    %v493 = vpop.xlane.xlu0 %492
    %v494 = vsub.f32 %v489, %v493
    %v495 = vmul.f32 %v494, %v488
    %vm496 = vcmask 1047558
    %vm497 = vmand %vm470, %vm496
    %v498 = vsel %vm497, %v495, 0.0
    %v499 = vadd.f32 %v490, %v498
    %500 = vst [vmem:[#allocation1] sm:$0xff] %v499
    %s501 = scalar_lea.vmem [#allocation0], 8
    %v502 = vld [vmem:[%s501] sm:$0xff]
    %s503 = scalar_lea.vmem [#allocation1], 8
    %v504 = vld [vmem:[%s503] sm:$0xff]
    %v505 = vmul.f32 %v504, %v472
    %506 = vadd.xlane.f32.xlu0 %v505
    %v507 = vpop.xlane.xlu0 %506
    %v508 = vsub.f32 %v502, %v507
    %v509 = vmul.f32 %v508, %v488
    %v510 = vsel %vm470, %v509, 0.0
    %v511 = vadd.f32 %v504, %v510
    %s512 = scalar_lea.vmem [#allocation1], 8
    %513 = vst [vmem:[%s512] sm:$0xff] %v511
    %s514 = scalar_lea.vmem [#allocation0], 16
    %v515 = vld [vmem:[%s514] sm:$0xff]
    %s516 = scalar_lea.vmem [#allocation1], 16
    %v517 = vld [vmem:[%s516] sm:$0xff]
    %v518 = vmul.f32 %v517, %v472
    %519 = vadd.xlane.f32.xlu0 %v518
    %v520 = vpop.xlane.xlu0 %519
    %v521 = vsub.f32 %v515, %v520
    %v522 = vmul.f32 %v521, %v488
    %v523 = vsel %vm470, %v522, 0.0
    %v524 = vadd.f32 %v517, %v523
    %s525 = scalar_lea.vmem [#allocation1], 16
    %526 = vst [vmem:[%s525] sm:$0xff] %v524
    %s527 = scalar_lea.vmem [#allocation0], 24
    %v528 = vld [vmem:[%s527] sm:$0xff]
    %s529 = scalar_lea.vmem [#allocation1], 24
    %v530 = vld [vmem:[%s529] sm:$0xff]
    %v531 = vmul.f32 %v530, %v472
    %532 = vadd.xlane.f32.xlu0 %v531
    %v533 = vpop.xlane.xlu0 %532
    %v534 = vsub.f32 %v528, %v533
    %v535 = vmul.f32 %v534, %v488
    %v536 = vsel %vm470, %v535, 0.0
    %v537 = vadd.f32 %v530, %v536
    %s538 = scalar_lea.vmem [#allocation1], 24
    %539 = vst [vmem:[%s538] sm:$0xff] %v537
    %vm540 = vcmask 64568
    %s541 = scalar_lea.vmem [#allocation1], 7
    %v542 = vld [vmem:[%s541] ss:$0 sm:$0xff]
    %s543 = scalar_lea.vmem [#allocation0], 7
    %v544 = vld [vmem:[%s543] ss:$0 sm:$0xff]
    %v545 = vmul.f32 %v542, %v542
    %546 = vadd.xlane.f32.xlu0 %v545
    %v547 = vpop.xlane.xlu0 %546
    %v548 = vsub.f32 %v544, %v547
    %v549 = vrsqrt.pop %v548
    %v550 = vmul.f32 %v549, %v548
    %v551 = vmul.f32 %v550, %v549
    %v552 = vmul.f32 0.5, %v551
    %v553 = vsub.f32 1.5, %v552
    %v554 = vmul.f32 %v549, %v553
    %vm555 = vweird.f32 %v548
    %vm556 = vweird.f32 %v549
    %vm557 = vmor %vm555, %vm556
    %v558 = vsel %vm557, %v549, %v554
    %v559 = vld [vmem:[#allocation0] sm:$0xff]
    %v560 = vld [vmem:[#allocation1] sm:$0xff]
    %v561 = vmul.f32 %v560, %v542
    %562 = vadd.xlane.f32.xlu0 %v561
    %v563 = vpop.xlane.xlu0 %562
    %v564 = vsub.f32 %v559, %v563
    %v565 = vmul.f32 %v564, %v558
    %vm566 = vcmask 1047559
    %vm567 = vmand %vm540, %vm566
    %v568 = vsel %vm567, %v565, 0.0
    %v569 = vadd.f32 %v560, %v568
    %570 = vst [vmem:[#allocation1] sm:$0xff] %v569
    %s571 = scalar_lea.vmem [#allocation0], 8
    %v572 = vld [vmem:[%s571] sm:$0xff]
    %s573 = scalar_lea.vmem [#allocation1], 8
    %v574 = vld [vmem:[%s573] sm:$0xff]
    %v575 = vmul.f32 %v574, %v542
    %576 = vadd.xlane.f32.xlu0 %v575
    %v577 = vpop.xlane.xlu0 %576
    %v578 = vsub.f32 %v572, %v577
    %v579 = vmul.f32 %v578, %v558
    %v580 = vsel %vm540, %v579, 0.0
    %v581 = vadd.f32 %v574, %v580
    %s582 = scalar_lea.vmem [#allocation1], 8
    %583 = vst [vmem:[%s582] sm:$0xff] %v581
    %s584 = scalar_lea.vmem [#allocation0], 16
    %v585 = vld [vmem:[%s584] sm:$0xff]
    %s586 = scalar_lea.vmem [#allocation1], 16
    %v587 = vld [vmem:[%s586] sm:$0xff]
    %v588 = vmul.f32 %v587, %v542
    %589 = vadd.xlane.f32.xlu0 %v588
    %v590 = vpop.xlane.xlu0 %589
    %v591 = vsub.f32 %v585, %v590
    %v592 = vmul.f32 %v591, %v558
    %v593 = vsel %vm540, %v592, 0.0
    %v594 = vadd.f32 %v587, %v593
    %s595 = scalar_lea.vmem [#allocation1], 16
    %596 = vst [vmem:[%s595] sm:$0xff] %v594
    %s597 = scalar_lea.vmem [#allocation0], 24
    %v598 = vld [vmem:[%s597] sm:$0xff]
    %s599 = scalar_lea.vmem [#allocation1], 24
    %v600 = vld [vmem:[%s599] sm:$0xff]
    %v601 = vmul.f32 %v600, %v542
    %602 = vadd.xlane.f32.xlu0 %v601
    %v603 = vpop.xlane.xlu0 %602
    %v604 = vsub.f32 %v598, %v603
    %v605 = vmul.f32 %v604, %v558
    %v606 = vsel %vm540, %v605, 0.0
    %v607 = vadd.f32 %v600, %v606
    %s608 = scalar_lea.vmem [#allocation1], 24
    %609 = vst [vmem:[%s608] sm:$0xff] %v607
    %vm610 = vcmask 72768
    %s611 = scalar_lea.vmem [#allocation1], 8
    %v612 = vld [vmem:[%s611] ss:$0 sm:$0xff]
    %s613 = scalar_lea.vmem [#allocation0], 8
    %v614 = vld [vmem:[%s613] ss:$0 sm:$0xff]
    %v615 = vmul.f32 %v612, %v612
    %616 = vadd.xlane.f32.xlu0 %v615
    %v617 = vpop.xlane.xlu0 %616
    %v618 = vsub.f32 %v614, %v617
    %v619 = vrsqrt.pop %v618
    %v620 = vmul.f32 %v619, %v618
    %v621 = vmul.f32 %v620, %v619
    %v622 = vmul.f32 0.5, %v621
    %v623 = vsub.f32 1.5, %v622
    %v624 = vmul.f32 %v619, %v623
    %vm625 = vweird.f32 %v618
    %vm626 = vweird.f32 %v619
    %vm627 = vmor %vm625, %vm626
    %v628 = vsel %vm627, %v619, %v624
    %s629 = scalar_lea.vmem [#allocation0], 8
    %v630 = vld [vmem:[%s629] sm:$0xff]
    %s631 = scalar_lea.vmem [#allocation1], 8
    %v632 = vld [vmem:[%s631] sm:$0xff]
    %v633 = vmul.f32 %v632, %v612
    %634 = vadd.xlane.f32.xlu0 %v633
    %v635 = vpop.xlane.xlu0 %634
    %v636 = vsub.f32 %v630, %v635
    %v637 = vmul.f32 %v636, %v628
    %v638 = vsel %vm610, %v637, 0.0
    %v639 = vadd.f32 %v632, %v638
    %s640 = scalar_lea.vmem [#allocation1], 8
    %641 = vst [vmem:[%s640] sm:$0xff] %v639
    %s642 = scalar_lea.vmem [#allocation0], 16
    %v643 = vld [vmem:[%s642] sm:$0xff]
    %s644 = scalar_lea.vmem [#allocation1], 16
    %v645 = vld [vmem:[%s644] sm:$0xff]
    %v646 = vmul.f32 %v645, %v612
    %647 = vadd.xlane.f32.xlu0 %v646
    %v648 = vpop.xlane.xlu0 %647
    %v649 = vsub.f32 %v643, %v648
    %v650 = vmul.f32 %v649, %v628
    %v651 = vsel %vm610, %v650, 0.0
    %v652 = vadd.f32 %v645, %v651
    %s653 = scalar_lea.vmem [#allocation1], 16
    %654 = vst [vmem:[%s653] sm:$0xff] %v652
    %s655 = scalar_lea.vmem [#allocation0], 24
    %v656 = vld [vmem:[%s655] sm:$0xff]
    %s657 = scalar_lea.vmem [#allocation1], 24
    %v658 = vld [vmem:[%s657] sm:$0xff]
    %v659 = vmul.f32 %v658, %v612
    %660 = vadd.xlane.f32.xlu0 %v659
    %v661 = vpop.xlane.xlu0 %660
    %v662 = vsub.f32 %v656, %v661
    %v663 = vmul.f32 %v662, %v628
    %v664 = vsel %vm610, %v663, 0.0
    %v665 = vadd.f32 %v658, %v664
    %s666 = scalar_lea.vmem [#allocation1], 24
    %667 = vst [vmem:[%s666] sm:$0xff] %v665
    %vm668 = vcmask 80968
    %s669 = scalar_lea.vmem [#allocation1], 9
    %v670 = vld [vmem:[%s669] ss:$0 sm:$0xff]
    %s671 = scalar_lea.vmem [#allocation0], 9
    %v672 = vld [vmem:[%s671] ss:$0 sm:$0xff]
    %v673 = vmul.f32 %v670, %v670
    %674 = vadd.xlane.f32.xlu0 %v673
    %v675 = vpop.xlane.xlu0 %674
    %v676 = vsub.f32 %v672, %v675
    %v677 = vrsqrt.pop %v676
    %v678 = vmul.f32 %v677, %v676
    %v679 = vmul.f32 %v678, %v677
    %v680 = vmul.f32 0.5, %v679
    %v681 = vsub.f32 1.5, %v680
    %v682 = vmul.f32 %v677, %v681
    %vm683 = vweird.f32 %v676
    %vm684 = vweird.f32 %v677
    %vm685 = vmor %vm683, %vm684
    %v686 = vsel %vm685, %v677, %v682
    %s687 = scalar_lea.vmem [#allocation0], 8
    %v688 = vld [vmem:[%s687] sm:$0xff]
    %s689 = scalar_lea.vmem [#allocation1], 8
    %v690 = vld [vmem:[%s689] sm:$0xff]
    %v691 = vmul.f32 %v690, %v670
    %692 = vadd.xlane.f32.xlu0 %v691
    %v693 = vpop.xlane.xlu0 %692
    %v694 = vsub.f32 %v688, %v693
    %v695 = vmul.f32 %v694, %v686
    %vm696 = vcmask 1047553
    %vm697 = vmand %vm668, %vm696
    %v698 = vsel %vm697, %v695, 0.0
    %v699 = vadd.f32 %v690, %v698
    %s700 = scalar_lea.vmem [#allocation1], 8
    %701 = vst [vmem:[%s700] sm:$0xff] %v699
    %s702 = scalar_lea.vmem [#allocation0], 16
    %v703 = vld [vmem:[%s702] sm:$0xff]
    %s704 = scalar_lea.vmem [#allocation1], 16
    %v705 = vld [vmem:[%s704] sm:$0xff]
    %v706 = vmul.f32 %v705, %v670
    %707 = vadd.xlane.f32.xlu0 %v706
    %v708 = vpop.xlane.xlu0 %707
    %v709 = vsub.f32 %v703, %v708
    %v710 = vmul.f32 %v709, %v686
    %v711 = vsel %vm668, %v710, 0.0
    %v712 = vadd.f32 %v705, %v711
    %s713 = scalar_lea.vmem [#allocation1], 16
    %714 = vst [vmem:[%s713] sm:$0xff] %v712
    %s715 = scalar_lea.vmem [#allocation0], 24
    %v716 = vld [vmem:[%s715] sm:$0xff]
    %s717 = scalar_lea.vmem [#allocation1], 24
    %v718 = vld [vmem:[%s717] sm:$0xff]
    %v719 = vmul.f32 %v718, %v670
    %720 = vadd.xlane.f32.xlu0 %v719
    %v721 = vpop.xlane.xlu0 %720
    %v722 = vsub.f32 %v716, %v721
    %v723 = vmul.f32 %v722, %v686
    %v724 = vsel %vm668, %v723, 0.0
    %v725 = vadd.f32 %v718, %v724
    %s726 = scalar_lea.vmem [#allocation1], 24
    %727 = vst [vmem:[%s726] sm:$0xff] %v725
    %vm728 = vcmask 89168
    %s729 = scalar_lea.vmem [#allocation1], 10
    %v730 = vld [vmem:[%s729] ss:$0 sm:$0xff]
    %s731 = scalar_lea.vmem [#allocation0], 10
    %v732 = vld [vmem:[%s731] ss:$0 sm:$0xff]
    %v733 = vmul.f32 %v730, %v730
    %734 = vadd.xlane.f32.xlu0 %v733
    %v735 = vpop.xlane.xlu0 %734
    %v736 = vsub.f32 %v732, %v735
    %v737 = vrsqrt.pop %v736
    %v738 = vmul.f32 %v737, %v736
    %v739 = vmul.f32 %v738, %v737
    %v740 = vmul.f32 0.5, %v739
    %v741 = vsub.f32 1.5, %v740
    %v742 = vmul.f32 %v737, %v741
    %vm743 = vweird.f32 %v736
    %vm744 = vweird.f32 %v737
    %vm745 = vmor %vm743, %vm744
    %v746 = vsel %vm745, %v737, %v742
    %s747 = scalar_lea.vmem [#allocation0], 8
    %v748 = vld [vmem:[%s747] sm:$0xff]
    %s749 = scalar_lea.vmem [#allocation1], 8
    %v750 = vld [vmem:[%s749] sm:$0xff]
    %v751 = vmul.f32 %v750, %v730
    %752 = vadd.xlane.f32.xlu0 %v751
    %v753 = vpop.xlane.xlu0 %752
    %v754 = vsub.f32 %v748, %v753
    %v755 = vmul.f32 %v754, %v746
    %vm756 = vcmask 1047554
    %vm757 = vmand %vm728, %vm756
    %v758 = vsel %vm757, %v755, 0.0
    %v759 = vadd.f32 %v750, %v758
    %s760 = scalar_lea.vmem [#allocation1], 8
    %761 = vst [vmem:[%s760] sm:$0xff] %v759
    %s762 = scalar_lea.vmem [#allocation0], 16
    %v763 = vld [vmem:[%s762] sm:$0xff]
    %s764 = scalar_lea.vmem [#allocation1], 16
    %v765 = vld [vmem:[%s764] sm:$0xff]
    %v766 = vmul.f32 %v765, %v730
    %767 = vadd.xlane.f32.xlu0 %v766
    %v768 = vpop.xlane.xlu0 %767
    %v769 = vsub.f32 %v763, %v768
    %v770 = vmul.f32 %v769, %v746
    %v771 = vsel %vm728, %v770, 0.0
    %v772 = vadd.f32 %v765, %v771
    %s773 = scalar_lea.vmem [#allocation1], 16
    %774 = vst [vmem:[%s773] sm:$0xff] %v772
    %s775 = scalar_lea.vmem [#allocation0], 24
    %v776 = vld [vmem:[%s775] sm:$0xff]
    %s777 = scalar_lea.vmem [#allocation1], 24
    %v778 = vld [vmem:[%s777] sm:$0xff]
    %v779 = vmul.f32 %v778, %v730
    %780 = vadd.xlane.f32.xlu0 %v779
    %v781 = vpop.xlane.xlu0 %780
    %v782 = vsub.f32 %v776, %v781
    %v783 = vmul.f32 %v782, %v746
    %v784 = vsel %vm728, %v783, 0.0
    %v785 = vadd.f32 %v778, %v784
    %s786 = scalar_lea.vmem [#allocation1], 24
    %787 = vst [vmem:[%s786] sm:$0xff] %v785
    %vm788 = vcmask 97368
    %s789 = scalar_lea.vmem [#allocation1], 11
    %v790 = vld [vmem:[%s789] ss:$0 sm:$0xff]
    %s791 = scalar_lea.vmem [#allocation0], 11
    %v792 = vld [vmem:[%s791] ss:$0 sm:$0xff]
    %v793 = vmul.f32 %v790, %v790
    %794 = vadd.xlane.f32.xlu0 %v793
    %v795 = vpop.xlane.xlu0 %794
    %v796 = vsub.f32 %v792, %v795
    %v797 = vrsqrt.pop %v796
    %v798 = vmul.f32 %v797, %v796
    %v799 = vmul.f32 %v798, %v797
    %v800 = vmul.f32 0.5, %v799
    %v801 = vsub.f32 1.5, %v800
    %v802 = vmul.f32 %v797, %v801
    %vm803 = vweird.f32 %v796
    %vm804 = vweird.f32 %v797
    %vm805 = vmor %vm803, %vm804
    %v806 = vsel %vm805, %v797, %v802
    %s807 = scalar_lea.vmem [#allocation0], 8
    %v808 = vld [vmem:[%s807] sm:$0xff]
    %s809 = scalar_lea.vmem [#allocation1], 8
    %v810 = vld [vmem:[%s809] sm:$0xff]
    %v811 = vmul.f32 %v810, %v790
    %812 = vadd.xlane.f32.xlu0 %v811
    %v813 = vpop.xlane.xlu0 %812
    %v814 = vsub.f32 %v808, %v813
    %v815 = vmul.f32 %v814, %v806
    %vm816 = vcmask 1047555
    %vm817 = vmand %vm788, %vm816
    %v818 = vsel %vm817, %v815, 0.0
    %v819 = vadd.f32 %v810, %v818
    %s820 = scalar_lea.vmem [#allocation1], 8
    %821 = vst [vmem:[%s820] sm:$0xff] %v819
    %s822 = scalar_lea.vmem [#allocation0], 16
    %v823 = vld [vmem:[%s822] sm:$0xff]
    %s824 = scalar_lea.vmem [#allocation1], 16
    %v825 = vld [vmem:[%s824] sm:$0xff]
    %v826 = vmul.f32 %v825, %v790
    %827 = vadd.xlane.f32.xlu0 %v826
    %v828 = vpop.xlane.xlu0 %827
    %v829 = vsub.f32 %v823, %v828
    %v830 = vmul.f32 %v829, %v806
    %v831 = vsel %vm788, %v830, 0.0
    %v832 = vadd.f32 %v825, %v831
    %s833 = scalar_lea.vmem [#allocation1], 16
    %834 = vst [vmem:[%s833] sm:$0xff] %v832
    %s835 = scalar_lea.vmem [#allocation0], 24
    %v836 = vld [vmem:[%s835] sm:$0xff]
    %s837 = scalar_lea.vmem [#allocation1], 24
    %v838 = vld [vmem:[%s837] sm:$0xff]
    %v839 = vmul.f32 %v838, %v790
    %840 = vadd.xlane.f32.xlu0 %v839
    %v841 = vpop.xlane.xlu0 %840
    %v842 = vsub.f32 %v836, %v841
    %v843 = vmul.f32 %v842, %v806
    %v844 = vsel %vm788, %v843, 0.0
    %v845 = vadd.f32 %v838, %v844
    %s846 = scalar_lea.vmem [#allocation1], 24
    %847 = vst [vmem:[%s846] sm:$0xff] %v845
    %vm848 = vcmask 105568
    %s849 = scalar_lea.vmem [#allocation1], 12
    %v850 = vld [vmem:[%s849] ss:$0 sm:$0xff]
    %s851 = scalar_lea.vmem [#allocation0], 12
    %v852 = vld [vmem:[%s851] ss:$0 sm:$0xff]
    %v853 = vmul.f32 %v850, %v850
    %854 = vadd.xlane.f32.xlu0 %v853
    %v855 = vpop.xlane.xlu0 %854
    %v856 = vsub.f32 %v852, %v855
    %v857 = vrsqrt.pop %v856
    %v858 = vmul.f32 %v857, %v856
    %v859 = vmul.f32 %v858, %v857
    %v860 = vmul.f32 0.5, %v859
    %v861 = vsub.f32 1.5, %v860
    %v862 = vmul.f32 %v857, %v861
    %vm863 = vweird.f32 %v856
    %vm864 = vweird.f32 %v857
    %vm865 = vmor %vm863, %vm864
    %v866 = vsel %vm865, %v857, %v862
    %s867 = scalar_lea.vmem [#allocation0], 8
    %v868 = vld [vmem:[%s867] sm:$0xff]
    %s869 = scalar_lea.vmem [#allocation1], 8
    %v870 = vld [vmem:[%s869] sm:$0xff]
    %v871 = vmul.f32 %v870, %v850
    %872 = vadd.xlane.f32.xlu0 %v871
    %v873 = vpop.xlane.xlu0 %872
    %v874 = vsub.f32 %v868, %v873
    %v875 = vmul.f32 %v874, %v866
    %vm876 = vcmask 1047556
    %vm877 = vmand %vm848, %vm876
    %v878 = vsel %vm877, %v875, 0.0
    %v879 = vadd.f32 %v870, %v878
    %s880 = scalar_lea.vmem [#allocation1], 8
    %881 = vst [vmem:[%s880] sm:$0xff] %v879
    %s882 = scalar_lea.vmem [#allocation0], 16
    %v883 = vld [vmem:[%s882] sm:$0xff]
    %s884 = scalar_lea.vmem [#allocation1], 16
    %v885 = vld [vmem:[%s884] sm:$0xff]
    %v886 = vmul.f32 %v885, %v850
    %887 = vadd.xlane.f32.xlu0 %v886
    %v888 = vpop.xlane.xlu0 %887
    %v889 = vsub.f32 %v883, %v888
    %v890 = vmul.f32 %v889, %v866
    %v891 = vsel %vm848, %v890, 0.0
    %v892 = vadd.f32 %v885, %v891
    %s893 = scalar_lea.vmem [#allocation1], 16
    %894 = vst [vmem:[%s893] sm:$0xff] %v892
    %s895 = scalar_lea.vmem [#allocation0], 24
    %v896 = vld [vmem:[%s895] sm:$0xff]
    %s897 = scalar_lea.vmem [#allocation1], 24
    %v898 = vld [vmem:[%s897] sm:$0xff]
    %v899 = vmul.f32 %v898, %v850
    %900 = vadd.xlane.f32.xlu0 %v899
    %v901 = vpop.xlane.xlu0 %900
    %v902 = vsub.f32 %v896, %v901
    %v903 = vmul.f32 %v902, %v866
    %v904 = vsel %vm848, %v903, 0.0
    %v905 = vadd.f32 %v898, %v904
    %s906 = scalar_lea.vmem [#allocation1], 24
    %907 = vst [vmem:[%s906] sm:$0xff] %v905
    %vm908 = vcmask 113768
    %s909 = scalar_lea.vmem [#allocation1], 13
    %v910 = vld [vmem:[%s909] ss:$0 sm:$0xff]
    %s911 = scalar_lea.vmem [#allocation0], 13
    %v912 = vld [vmem:[%s911] ss:$0 sm:$0xff]
    %v913 = vmul.f32 %v910, %v910
    %914 = vadd.xlane.f32.xlu0 %v913
    %v915 = vpop.xlane.xlu0 %914
    %v916 = vsub.f32 %v912, %v915
    %v917 = vrsqrt.pop %v916
    %v918 = vmul.f32 %v917, %v916
    %v919 = vmul.f32 %v918, %v917
    %v920 = vmul.f32 0.5, %v919
    %v921 = vsub.f32 1.5, %v920
    %v922 = vmul.f32 %v917, %v921
    %vm923 = vweird.f32 %v916
    %vm924 = vweird.f32 %v917
    %vm925 = vmor %vm923, %vm924
    %v926 = vsel %vm925, %v917, %v922
    %s927 = scalar_lea.vmem [#allocation0], 8
    %v928 = vld [vmem:[%s927] sm:$0xff]
    %s929 = scalar_lea.vmem [#allocation1], 8
    %v930 = vld [vmem:[%s929] sm:$0xff]
    %v931 = vmul.f32 %v930, %v910
    %932 = vadd.xlane.f32.xlu0 %v931
    %v933 = vpop.xlane.xlu0 %932
    %v934 = vsub.f32 %v928, %v933
    %v935 = vmul.f32 %v934, %v926
    %vm936 = vcmask 1047557
    %vm937 = vmand %vm908, %vm936
    %v938 = vsel %vm937, %v935, 0.0
    %v939 = vadd.f32 %v930, %v938
    %s940 = scalar_lea.vmem [#allocation1], 8
    %941 = vst [vmem:[%s940] sm:$0xff] %v939
    %s942 = scalar_lea.vmem [#allocation0], 16
    %v943 = vld [vmem:[%s942] sm:$0xff]
    %s944 = scalar_lea.vmem [#allocation1], 16
    %v945 = vld [vmem:[%s944] sm:$0xff]
    %v946 = vmul.f32 %v945, %v910
    %947 = vadd.xlane.f32.xlu0 %v946
    %v948 = vpop.xlane.xlu0 %947
    %v949 = vsub.f32 %v943, %v948
    %v950 = vmul.f32 %v949, %v926
    %v951 = vsel %vm908, %v950, 0.0
    %v952 = vadd.f32 %v945, %v951
    %s953 = scalar_lea.vmem [#allocation1], 16
    %954 = vst [vmem:[%s953] sm:$0xff] %v952
    %s955 = scalar_lea.vmem [#allocation0], 24
    %v956 = vld [vmem:[%s955] sm:$0xff]
    %s957 = scalar_lea.vmem [#allocation1], 24
    %v958 = vld [vmem:[%s957] sm:$0xff]
    %v959 = vmul.f32 %v958, %v910
    %960 = vadd.xlane.f32.xlu0 %v959
    %v961 = vpop.xlane.xlu0 %960
    %v962 = vsub.f32 %v956, %v961
    %v963 = vmul.f32 %v962, %v926
    %v964 = vsel %vm908, %v963, 0.0
    %v965 = vadd.f32 %v958, %v964
    %s966 = scalar_lea.vmem [#allocation1], 24
    %967 = vst [vmem:[%s966] sm:$0xff] %v965
    %vm968 = vcmask 121968
    %s969 = scalar_lea.vmem [#allocation1], 14
    %v970 = vld [vmem:[%s969] ss:$0 sm:$0xff]
    %s971 = scalar_lea.vmem [#allocation0], 14
    %v972 = vld [vmem:[%s971] ss:$0 sm:$0xff]
    %v973 = vmul.f32 %v970, %v970
    %974 = vadd.xlane.f32.xlu0 %v973
    %v975 = vpop.xlane.xlu0 %974
    %v976 = vsub.f32 %v972, %v975
    %v977 = vrsqrt.pop %v976
    %v978 = vmul.f32 %v977, %v976
    %v979 = vmul.f32 %v978, %v977
    %v980 = vmul.f32 0.5, %v979
    %v981 = vsub.f32 1.5, %v980
    %v982 = vmul.f32 %v977, %v981
    %vm983 = vweird.f32 %v976
    %vm984 = vweird.f32 %v977
    %vm985 = vmor %vm983, %vm984
    %v986 = vsel %vm985, %v977, %v982
    %s987 = scalar_lea.vmem [#allocation0], 8
    %v988 = vld [vmem:[%s987] sm:$0xff]
    %s989 = scalar_lea.vmem [#allocation1], 8
    %v990 = vld [vmem:[%s989] sm:$0xff]
    %v991 = vmul.f32 %v990, %v970
    %992 = vadd.xlane.f32.xlu0 %v991
    %v993 = vpop.xlane.xlu0 %992
    %v994 = vsub.f32 %v988, %v993
    %v995 = vmul.f32 %v994, %v986
    %vm996 = vcmask 1047558
    %vm997 = vmand %vm968, %vm996
    %v998 = vsel %vm997, %v995, 0.0
    %v999 = vadd.f32 %v990, %v998
    %s1000 = scalar_lea.vmem [#allocation1], 8
    %1001 = vst [vmem:[%s1000] sm:$0xff] %v999
    %s1002 = scalar_lea.vmem [#allocation0], 16
    %v1003 = vld [vmem:[%s1002] sm:$0xff]
    %s1004 = scalar_lea.vmem [#allocation1], 16
    %v1005 = vld [vmem:[%s1004] sm:$0xff]
    %v1006 = vmul.f32 %v1005, %v970
    %1007 = vadd.xlane.f32.xlu0 %v1006
    %v1008 = vpop.xlane.xlu0 %1007
    %v1009 = vsub.f32 %v1003, %v1008
    %v1010 = vmul.f32 %v1009, %v986
    %v1011 = vsel %vm968, %v1010, 0.0
    %v1012 = vadd.f32 %v1005, %v1011
    %s1013 = scalar_lea.vmem [#allocation1], 16
    %1014 = vst [vmem:[%s1013] sm:$0xff] %v1012
    %s1015 = scalar_lea.vmem [#allocation0], 24
    %v1016 = vld [vmem:[%s1015] sm:$0xff]
    %s1017 = scalar_lea.vmem [#allocation1], 24
    %v1018 = vld [vmem:[%s1017] sm:$0xff]
    %v1019 = vmul.f32 %v1018, %v970
    %1020 = vadd.xlane.f32.xlu0 %v1019
    %v1021 = vpop.xlane.xlu0 %1020
    %v1022 = vsub.f32 %v1016, %v1021
    %v1023 = vmul.f32 %v1022, %v986
    %v1024 = vsel %vm968, %v1023, 0.0
    %v1025 = vadd.f32 %v1018, %v1024
    %s1026 = scalar_lea.vmem [#allocation1], 24
    %1027 = vst [vmem:[%s1026] sm:$0xff] %v1025
    %vm1028 = vcmask 130168
    %s1029 = scalar_lea.vmem [#allocation1], 15
    %v1030 = vld [vmem:[%s1029] ss:$0 sm:$0xff]
    %s1031 = scalar_lea.vmem [#allocation0], 15
    %v1032 = vld [vmem:[%s1031] ss:$0 sm:$0xff]
    %v1033 = vmul.f32 %v1030, %v1030
    %1034 = vadd.xlane.f32.xlu0 %v1033
    %v1035 = vpop.xlane.xlu0 %1034
    %v1036 = vsub.f32 %v1032, %v1035
    %v1037 = vrsqrt.pop %v1036
    %v1038 = vmul.f32 %v1037, %v1036
    %v1039 = vmul.f32 %v1038, %v1037
    %v1040 = vmul.f32 0.5, %v1039
    %v1041 = vsub.f32 1.5, %v1040
    %v1042 = vmul.f32 %v1037, %v1041
    %vm1043 = vweird.f32 %v1036
    %vm1044 = vweird.f32 %v1037
    %vm1045 = vmor %vm1043, %vm1044
    %v1046 = vsel %vm1045, %v1037, %v1042
    %s1047 = scalar_lea.vmem [#allocation0], 8
    %v1048 = vld [vmem:[%s1047] sm:$0xff]
    %s1049 = scalar_lea.vmem [#allocation1], 8
    %v1050 = vld [vmem:[%s1049] sm:$0xff]
    %v1051 = vmul.f32 %v1050, %v1030
    %1052 = vadd.xlane.f32.xlu0 %v1051
    %v1053 = vpop.xlane.xlu0 %1052
    %v1054 = vsub.f32 %v1048, %v1053
    %v1055 = vmul.f32 %v1054, %v1046
    %vm1056 = vcmask 1047559
    %vm1057 = vmand %vm1028, %vm1056
    %v1058 = vsel %vm1057, %v1055, 0.0
    %v1059 = vadd.f32 %v1050, %v1058
    %s1060 = scalar_lea.vmem [#allocation1], 8
    %1061 = vst [vmem:[%s1060] sm:$0xff] %v1059
    %s1062 = scalar_lea.vmem [#allocation0], 16
    %v1063 = vld [vmem:[%s1062] sm:$0xff]
    %s1064 = scalar_lea.vmem [#allocation1], 16
    %v1065 = vld [vmem:[%s1064] sm:$0xff]
    %v1066 = vmul.f32 %v1065, %v1030
    %1067 = vadd.xlane.f32.xlu0 %v1066
    %v1068 = vpop.xlane.xlu0 %1067
    %v1069 = vsub.f32 %v1063, %v1068
    %v1070 = vmul.f32 %v1069, %v1046
    %v1071 = vsel %vm1028, %v1070, 0.0
    %v1072 = vadd.f32 %v1065, %v1071
    %s1073 = scalar_lea.vmem [#allocation1], 16
    %1074 = vst [vmem:[%s1073] sm:$0xff] %v1072
    %s1075 = scalar_lea.vmem [#allocation0], 24
    %v1076 = vld [vmem:[%s1075] sm:$0xff]
    %s1077 = scalar_lea.vmem [#allocation1], 24
    %v1078 = vld [vmem:[%s1077] sm:$0xff]
    %v1079 = vmul.f32 %v1078, %v1030
    %1080 = vadd.xlane.f32.xlu0 %v1079
    %v1081 = vpop.xlane.xlu0 %1080
    %v1082 = vsub.f32 %v1076, %v1081
    %v1083 = vmul.f32 %v1082, %v1046
    %v1084 = vsel %vm1028, %v1083, 0.0
    %v1085 = vadd.f32 %v1078, %v1084
    %s1086 = scalar_lea.vmem [#allocation1], 24
    %1087 = vst [vmem:[%s1086] sm:$0xff] %v1085
    %vm1088 = vcmask 138368
    %s1089 = scalar_lea.vmem [#allocation1], 16
    %v1090 = vld [vmem:[%s1089] ss:$0 sm:$0xff]
    %s1091 = scalar_lea.vmem [#allocation0], 16
    %v1092 = vld [vmem:[%s1091] ss:$0 sm:$0xff]
    %v1093 = vmul.f32 %v1090, %v1090
    %1094 = vadd.xlane.f32.xlu0 %v1093
    %v1095 = vpop.xlane.xlu0 %1094
    %v1096 = vsub.f32 %v1092, %v1095
    %v1097 = vrsqrt.pop %v1096
    %v1098 = vmul.f32 %v1097, %v1096
    %v1099 = vmul.f32 %v1098, %v1097
    %v1100 = vmul.f32 0.5, %v1099
    %v1101 = vsub.f32 1.5, %v1100
    %v1102 = vmul.f32 %v1097, %v1101
    %vm1103 = vweird.f32 %v1096
    %vm1104 = vweird.f32 %v1097
    %vm1105 = vmor %vm1103, %vm1104
    %v1106 = vsel %vm1105, %v1097, %v1102
    %s1107 = scalar_lea.vmem [#allocation0], 16
    %v1108 = vld [vmem:[%s1107] sm:$0xff]
    %s1109 = scalar_lea.vmem [#allocation1], 16
    %v1110 = vld [vmem:[%s1109] sm:$0xff]
    %v1111 = vmul.f32 %v1110, %v1090
    %1112 = vadd.xlane.f32.xlu0 %v1111
    %v1113 = vpop.xlane.xlu0 %1112
    %v1114 = vsub.f32 %v1108, %v1113
    %v1115 = vmul.f32 %v1114, %v1106
    %v1116 = vsel %vm1088, %v1115, 0.0
    %v1117 = vadd.f32 %v1110, %v1116
    %s1118 = scalar_lea.vmem [#allocation1], 16
    %1119 = vst [vmem:[%s1118] sm:$0xff] %v1117
    %s1120 = scalar_lea.vmem [#allocation0], 24
    %v1121 = vld [vmem:[%s1120] sm:$0xff]
    %s1122 = scalar_lea.vmem [#allocation1], 24
    %v1123 = vld [vmem:[%s1122] sm:$0xff]
    %v1124 = vmul.f32 %v1123, %v1090
    %1125 = vadd.xlane.f32.xlu0 %v1124
    %v1126 = vpop.xlane.xlu0 %1125
    %v1127 = vsub.f32 %v1121, %v1126
    %v1128 = vmul.f32 %v1127, %v1106
    %v1129 = vsel %vm1088, %v1128, 0.0
    %v1130 = vadd.f32 %v1123, %v1129
    %s1131 = scalar_lea.vmem [#allocation1], 24
    %1132 = vst [vmem:[%s1131] sm:$0xff] %v1130
    %vm1133 = vcmask 146568
    %s1134 = scalar_lea.vmem [#allocation1], 17
    %v1135 = vld [vmem:[%s1134] ss:$0 sm:$0xff]
    %s1136 = scalar_lea.vmem [#allocation0], 17
    %v1137 = vld [vmem:[%s1136] ss:$0 sm:$0xff]
    %v1138 = vmul.f32 %v1135, %v1135
    %1139 = vadd.xlane.f32.xlu0 %v1138
    %v1140 = vpop.xlane.xlu0 %1139
    %v1141 = vsub.f32 %v1137, %v1140
    %v1142 = vrsqrt.pop %v1141
    %v1143 = vmul.f32 %v1142, %v1141
    %v1144 = vmul.f32 %v1143, %v1142
    %v1145 = vmul.f32 0.5, %v1144
    %v1146 = vsub.f32 1.5, %v1145
    %v1147 = vmul.f32 %v1142, %v1146
    %vm1148 = vweird.f32 %v1141
    %vm1149 = vweird.f32 %v1142
    %vm1150 = vmor %vm1148, %vm1149
    %v1151 = vsel %vm1150, %v1142, %v1147
    %s1152 = scalar_lea.vmem [#allocation0], 16
    %v1153 = vld [vmem:[%s1152] sm:$0xff]
    %s1154 = scalar_lea.vmem [#allocation1], 16
    %v1155 = vld [vmem:[%s1154] sm:$0xff]
    %v1156 = vmul.f32 %v1155, %v1135
    %1157 = vadd.xlane.f32.xlu0 %v1156
    %v1158 = vpop.xlane.xlu0 %1157
    %v1159 = vsub.f32 %v1153, %v1158
    %v1160 = vmul.f32 %v1159, %v1151
    %vm1161 = vcmask 1047553
    %vm1162 = vmand %vm1133, %vm1161
    %v1163 = vsel %vm1162, %v1160, 0.0
    %v1164 = vadd.f32 %v1155, %v1163
    %s1165 = scalar_lea.vmem [#allocation1], 16
    %1166 = vst [vmem:[%s1165] sm:$0xff] %v1164
    %s1167 = scalar_lea.vmem [#allocation0], 24
    %v1168 = vld [vmem:[%s1167] sm:$0xff]
    %s1169 = scalar_lea.vmem [#allocation1], 24
    %v1170 = vld [vmem:[%s1169] sm:$0xff]
    %v1171 = vmul.f32 %v1170, %v1135
    %1172 = vadd.xlane.f32.xlu0 %v1171
    %v1173 = vpop.xlane.xlu0 %1172
    %v1174 = vsub.f32 %v1168, %v1173
    %v1175 = vmul.f32 %v1174, %v1151
    %v1176 = vsel %vm1133, %v1175, 0.0
    %v1177 = vadd.f32 %v1170, %v1176
    %s1178 = scalar_lea.vmem [#allocation1], 24
    %1179 = vst [vmem:[%s1178] sm:$0xff] %v1177
    %vm1180 = vcmask 154768
    %s1181 = scalar_lea.vmem [#allocation1], 18
    %v1182 = vld [vmem:[%s1181] ss:$0 sm:$0xff]
    %s1183 = scalar_lea.vmem [#allocation0], 18
    %v1184 = vld [vmem:[%s1183] ss:$0 sm:$0xff]
    %v1185 = vmul.f32 %v1182, %v1182
    %1186 = vadd.xlane.f32.xlu0 %v1185
    %v1187 = vpop.xlane.xlu0 %1186
    %v1188 = vsub.f32 %v1184, %v1187
    %v1189 = vrsqrt.pop %v1188
    %v1190 = vmul.f32 %v1189, %v1188
    %v1191 = vmul.f32 %v1190, %v1189
    %v1192 = vmul.f32 0.5, %v1191
    %v1193 = vsub.f32 1.5, %v1192
    %v1194 = vmul.f32 %v1189, %v1193
    %vm1195 = vweird.f32 %v1188
    %vm1196 = vweird.f32 %v1189
    %vm1197 = vmor %vm1195, %vm1196
    %v1198 = vsel %vm1197, %v1189, %v1194
    %s1199 = scalar_lea.vmem [#allocation0], 16
    %v1200 = vld [vmem:[%s1199] sm:$0xff]
    %s1201 = scalar_lea.vmem [#allocation1], 16
    %v1202 = vld [vmem:[%s1201] sm:$0xff]
    %v1203 = vmul.f32 %v1202, %v1182
    %1204 = vadd.xlane.f32.xlu0 %v1203
    %v1205 = vpop.xlane.xlu0 %1204
    %v1206 = vsub.f32 %v1200, %v1205
    %v1207 = vmul.f32 %v1206, %v1198
    %vm1208 = vcmask 1047554
    %vm1209 = vmand %vm1180, %vm1208
    %v1210 = vsel %vm1209, %v1207, 0.0
    %v1211 = vadd.f32 %v1202, %v1210
    %s1212 = scalar_lea.vmem [#allocation1], 16
    %1213 = vst [vmem:[%s1212] sm:$0xff] %v1211
    %s1214 = scalar_lea.vmem [#allocation0], 24
    %v1215 = vld [vmem:[%s1214] sm:$0xff]
    %s1216 = scalar_lea.vmem [#allocation1], 24
    %v1217 = vld [vmem:[%s1216] sm:$0xff]
    %v1218 = vmul.f32 %v1217, %v1182
    %1219 = vadd.xlane.f32.xlu0 %v1218
    %v1220 = vpop.xlane.xlu0 %1219
    %v1221 = vsub.f32 %v1215, %v1220
    %v1222 = vmul.f32 %v1221, %v1198
    %v1223 = vsel %vm1180, %v1222, 0.0
    %v1224 = vadd.f32 %v1217, %v1223
    %s1225 = scalar_lea.vmem [#allocation1], 24
    %1226 = vst [vmem:[%s1225] sm:$0xff] %v1224
    %vm1227 = vcmask 162968
    %s1228 = scalar_lea.vmem [#allocation1], 19
    %v1229 = vld [vmem:[%s1228] ss:$0 sm:$0xff]
    %s1230 = scalar_lea.vmem [#allocation0], 19
    %v1231 = vld [vmem:[%s1230] ss:$0 sm:$0xff]
    %v1232 = vmul.f32 %v1229, %v1229
    %1233 = vadd.xlane.f32.xlu0 %v1232
    %v1234 = vpop.xlane.xlu0 %1233
    %v1235 = vsub.f32 %v1231, %v1234
    %v1236 = vrsqrt.pop %v1235
    %v1237 = vmul.f32 %v1236, %v1235
    %v1238 = vmul.f32 %v1237, %v1236
    %v1239 = vmul.f32 0.5, %v1238
    %v1240 = vsub.f32 1.5, %v1239
    %v1241 = vmul.f32 %v1236, %v1240
    %vm1242 = vweird.f32 %v1235
    %vm1243 = vweird.f32 %v1236
    %vm1244 = vmor %vm1242, %vm1243
    %v1245 = vsel %vm1244, %v1236, %v1241
    %s1246 = scalar_lea.vmem [#allocation0], 16
    %v1247 = vld [vmem:[%s1246] sm:$0xff]
    %s1248 = scalar_lea.vmem [#allocation1], 16
    %v1249 = vld [vmem:[%s1248] sm:$0xff]
    %v1250 = vmul.f32 %v1249, %v1229
    %1251 = vadd.xlane.f32.xlu0 %v1250
    %v1252 = vpop.xlane.xlu0 %1251
    %v1253 = vsub.f32 %v1247, %v1252
    %v1254 = vmul.f32 %v1253, %v1245
    %vm1255 = vcmask 1047555
    %vm1256 = vmand %vm1227, %vm1255
    %v1257 = vsel %vm1256, %v1254, 0.0
    %v1258 = vadd.f32 %v1249, %v1257
    %s1259 = scalar_lea.vmem [#allocation1], 16
    %1260 = vst [vmem:[%s1259] sm:$0xff] %v1258
    %s1261 = scalar_lea.vmem [#allocation0], 24
    %v1262 = vld [vmem:[%s1261] sm:$0xff]
    %s1263 = scalar_lea.vmem [#allocation1], 24
    %v1264 = vld [vmem:[%s1263] sm:$0xff]
    %v1265 = vmul.f32 %v1264, %v1229
    %1266 = vadd.xlane.f32.xlu0 %v1265
    %v1267 = vpop.xlane.xlu0 %1266
    %v1268 = vsub.f32 %v1262, %v1267
    %v1269 = vmul.f32 %v1268, %v1245
    %v1270 = vsel %vm1227, %v1269, 0.0
    %v1271 = vadd.f32 %v1264, %v1270
    %s1272 = scalar_lea.vmem [#allocation1], 24
    %1273 = vst [vmem:[%s1272] sm:$0xff] %v1271
    %vm1274 = vcmask 171168
    %s1275 = scalar_lea.vmem [#allocation1], 20
    %v1276 = vld [vmem:[%s1275] ss:$0 sm:$0xff]
    %s1277 = scalar_lea.vmem [#allocation0], 20
    %v1278 = vld [vmem:[%s1277] ss:$0 sm:$0xff]
    %v1279 = vmul.f32 %v1276, %v1276
    %1280 = vadd.xlane.f32.xlu0 %v1279
    %v1281 = vpop.xlane.xlu0 %1280
    %v1282 = vsub.f32 %v1278, %v1281
    %v1283 = vrsqrt.pop %v1282
    %v1284 = vmul.f32 %v1283, %v1282
    %v1285 = vmul.f32 %v1284, %v1283
    %v1286 = vmul.f32 0.5, %v1285
    %v1287 = vsub.f32 1.5, %v1286
    %v1288 = vmul.f32 %v1283, %v1287
    %vm1289 = vweird.f32 %v1282
    %vm1290 = vweird.f32 %v1283
    %vm1291 = vmor %vm1289, %vm1290
    %v1292 = vsel %vm1291, %v1283, %v1288
    %s1293 = scalar_lea.vmem [#allocation0], 16
    %v1294 = vld [vmem:[%s1293] sm:$0xff]
    %s1295 = scalar_lea.vmem [#allocation1], 16
    %v1296 = vld [vmem:[%s1295] sm:$0xff]
    %v1297 = vmul.f32 %v1296, %v1276
    %1298 = vadd.xlane.f32.xlu0 %v1297
    %v1299 = vpop.xlane.xlu0 %1298
    %v1300 = vsub.f32 %v1294, %v1299
    %v1301 = vmul.f32 %v1300, %v1292
    %vm1302 = vcmask 1047556
    %vm1303 = vmand %vm1274, %vm1302
    %v1304 = vsel %vm1303, %v1301, 0.0
    %v1305 = vadd.f32 %v1296, %v1304
    %s1306 = scalar_lea.vmem [#allocation1], 16
    %1307 = vst [vmem:[%s1306] sm:$0xff] %v1305
    %s1308 = scalar_lea.vmem [#allocation0], 24
    %v1309 = vld [vmem:[%s1308] sm:$0xff]
    %s1310 = scalar_lea.vmem [#allocation1], 24
    %v1311 = vld [vmem:[%s1310] sm:$0xff]
    %v1312 = vmul.f32 %v1311, %v1276
    %1313 = vadd.xlane.f32.xlu0 %v1312
    %v1314 = vpop.xlane.xlu0 %1313
    %v1315 = vsub.f32 %v1309, %v1314
    %v1316 = vmul.f32 %v1315, %v1292
    %v1317 = vsel %vm1274, %v1316, 0.0
    %v1318 = vadd.f32 %v1311, %v1317
    %s1319 = scalar_lea.vmem [#allocation1], 24
    %1320 = vst [vmem:[%s1319] sm:$0xff] %v1318
    %vm1321 = vcmask 179368
    %s1322 = scalar_lea.vmem [#allocation1], 21
    %v1323 = vld [vmem:[%s1322] ss:$0 sm:$0xff]
    %s1324 = scalar_lea.vmem [#allocation0], 21
    %v1325 = vld [vmem:[%s1324] ss:$0 sm:$0xff]
    %v1326 = vmul.f32 %v1323, %v1323
    %1327 = vadd.xlane.f32.xlu0 %v1326
    %v1328 = vpop.xlane.xlu0 %1327
    %v1329 = vsub.f32 %v1325, %v1328
    %v1330 = vrsqrt.pop %v1329
    %v1331 = vmul.f32 %v1330, %v1329
    %v1332 = vmul.f32 %v1331, %v1330
    %v1333 = vmul.f32 0.5, %v1332
    %v1334 = vsub.f32 1.5, %v1333
    %v1335 = vmul.f32 %v1330, %v1334
    %vm1336 = vweird.f32 %v1329
    %vm1337 = vweird.f32 %v1330
    %vm1338 = vmor %vm1336, %vm1337
    %v1339 = vsel %vm1338, %v1330, %v1335
    %s1340 = scalar_lea.vmem [#allocation0], 16
    %v1341 = vld [vmem:[%s1340] sm:$0xff]
    %s1342 = scalar_lea.vmem [#allocation1], 16
    %v1343 = vld [vmem:[%s1342] sm:$0xff]
    %v1344 = vmul.f32 %v1343, %v1323
    %1345 = vadd.xlane.f32.xlu0 %v1344
    %v1346 = vpop.xlane.xlu0 %1345
    %v1347 = vsub.f32 %v1341, %v1346
    %v1348 = vmul.f32 %v1347, %v1339
    %vm1349 = vcmask 1047557
    %vm1350 = vmand %vm1321, %vm1349
    %v1351 = vsel %vm1350, %v1348, 0.0
    %v1352 = vadd.f32 %v1343, %v1351
    %s1353 = scalar_lea.vmem [#allocation1], 16
    %1354 = vst [vmem:[%s1353] sm:$0xff] %v1352
    %s1355 = scalar_lea.vmem [#allocation0], 24
    %v1356 = vld [vmem:[%s1355] sm:$0xff]
    %s1357 = scalar_lea.vmem [#allocation1], 24
    %v1358 = vld [vmem:[%s1357] sm:$0xff]
    %v1359 = vmul.f32 %v1358, %v1323
    %1360 = vadd.xlane.f32.xlu0 %v1359
    %v1361 = vpop.xlane.xlu0 %1360
    %v1362 = vsub.f32 %v1356, %v1361
    %v1363 = vmul.f32 %v1362, %v1339
    %v1364 = vsel %vm1321, %v1363, 0.0
    %v1365 = vadd.f32 %v1358, %v1364
    %s1366 = scalar_lea.vmem [#allocation1], 24
    %1367 = vst [vmem:[%s1366] sm:$0xff] %v1365
    %vm1368 = vcmask 187568
    %s1369 = scalar_lea.vmem [#allocation1], 22
    %v1370 = vld [vmem:[%s1369] ss:$0 sm:$0xff]
    %s1371 = scalar_lea.vmem [#allocation0], 22
    %v1372 = vld [vmem:[%s1371] ss:$0 sm:$0xff]
    %v1373 = vmul.f32 %v1370, %v1370
    %1374 = vadd.xlane.f32.xlu0 %v1373
    %v1375 = vpop.xlane.xlu0 %1374
    %v1376 = vsub.f32 %v1372, %v1375
    %v1377 = vrsqrt.pop %v1376
    %v1378 = vmul.f32 %v1377, %v1376
    %v1379 = vmul.f32 %v1378, %v1377
    %v1380 = vmul.f32 0.5, %v1379
    %v1381 = vsub.f32 1.5, %v1380
    %v1382 = vmul.f32 %v1377, %v1381
    %vm1383 = vweird.f32 %v1376
    %vm1384 = vweird.f32 %v1377
    %vm1385 = vmor %vm1383, %vm1384
    %v1386 = vsel %vm1385, %v1377, %v1382
    %s1387 = scalar_lea.vmem [#allocation0], 16
    %v1388 = vld [vmem:[%s1387] sm:$0xff]
    %s1389 = scalar_lea.vmem [#allocation1], 16
    %v1390 = vld [vmem:[%s1389] sm:$0xff]
    %v1391 = vmul.f32 %v1390, %v1370
    %1392 = vadd.xlane.f32.xlu0 %v1391
    %v1393 = vpop.xlane.xlu0 %1392
    %v1394 = vsub.f32 %v1388, %v1393
    %v1395 = vmul.f32 %v1394, %v1386
    %vm1396 = vcmask 1047558
    %vm1397 = vmand %vm1368, %vm1396
    %v1398 = vsel %vm1397, %v1395, 0.0
    %v1399 = vadd.f32 %v1390, %v1398
    %s1400 = scalar_lea.vmem [#allocation1], 16
    %1401 = vst [vmem:[%s1400] sm:$0xff] %v1399
    %s1402 = scalar_lea.vmem [#allocation0], 24
    %v1403 = vld [vmem:[%s1402] sm:$0xff]
    %s1404 = scalar_lea.vmem [#allocation1], 24
    %v1405 = vld [vmem:[%s1404] sm:$0xff]
    %v1406 = vmul.f32 %v1405, %v1370
    %1407 = vadd.xlane.f32.xlu0 %v1406
    %v1408 = vpop.xlane.xlu0 %1407
    %v1409 = vsub.f32 %v1403, %v1408
    %v1410 = vmul.f32 %v1409, %v1386
    %v1411 = vsel %vm1368, %v1410, 0.0
    %v1412 = vadd.f32 %v1405, %v1411
    %s1413 = scalar_lea.vmem [#allocation1], 24
    %1414 = vst [vmem:[%s1413] sm:$0xff] %v1412
    %vm1415 = vcmask 195768
    %s1416 = scalar_lea.vmem [#allocation1], 23
    %v1417 = vld [vmem:[%s1416] ss:$0 sm:$0xff]
    %s1418 = scalar_lea.vmem [#allocation0], 23
    %v1419 = vld [vmem:[%s1418] ss:$0 sm:$0xff]
    %v1420 = vmul.f32 %v1417, %v1417
    %1421 = vadd.xlane.f32.xlu0 %v1420
    %v1422 = vpop.xlane.xlu0 %1421
    %v1423 = vsub.f32 %v1419, %v1422
    %v1424 = vrsqrt.pop %v1423
    %v1425 = vmul.f32 %v1424, %v1423
    %v1426 = vmul.f32 %v1425, %v1424
    %v1427 = vmul.f32 0.5, %v1426
    %v1428 = vsub.f32 1.5, %v1427
    %v1429 = vmul.f32 %v1424, %v1428
    %vm1430 = vweird.f32 %v1423
    %vm1431 = vweird.f32 %v1424
    %vm1432 = vmor %vm1430, %vm1431
    %v1433 = vsel %vm1432, %v1424, %v1429
    %s1434 = scalar_lea.vmem [#allocation0], 16
    %v1435 = vld [vmem:[%s1434] sm:$0xff]
    %s1436 = scalar_lea.vmem [#allocation1], 16
    %v1437 = vld [vmem:[%s1436] sm:$0xff]
    %v1438 = vmul.f32 %v1437, %v1417
    %1439 = vadd.xlane.f32.xlu0 %v1438
    %v1440 = vpop.xlane.xlu0 %1439
    %v1441 = vsub.f32 %v1435, %v1440
    %v1442 = vmul.f32 %v1441, %v1433
    %vm1443 = vcmask 1047559
    %vm1444 = vmand %vm1415, %vm1443
    %v1445 = vsel %vm1444, %v1442, 0.0
    %v1446 = vadd.f32 %v1437, %v1445
    %s1447 = scalar_lea.vmem [#allocation1], 16
    %1448 = vst [vmem:[%s1447] sm:$0xff] %v1446
    %s1449 = scalar_lea.vmem [#allocation0], 24
    %v1450 = vld [vmem:[%s1449] sm:$0xff]
    %s1451 = scalar_lea.vmem [#allocation1], 24
    %v1452 = vld [vmem:[%s1451] sm:$0xff]
    %v1453 = vmul.f32 %v1452, %v1417
    %1454 = vadd.xlane.f32.xlu0 %v1453
    %v1455 = vpop.xlane.xlu0 %1454
    %v1456 = vsub.f32 %v1450, %v1455
    %v1457 = vmul.f32 %v1456, %v1433
    %v1458 = vsel %vm1415, %v1457, 0.0
    %v1459 = vadd.f32 %v1452, %v1458
    %s1460 = scalar_lea.vmem [#allocation1], 24
    %1461 = vst [vmem:[%s1460] sm:$0xff] %v1459
    %vm1462 = vcmask 203968
    %s1463 = scalar_lea.vmem [#allocation1], 24
    %v1464 = vld [vmem:[%s1463] ss:$0 sm:$0xff]
    %s1465 = scalar_lea.vmem [#allocation0], 24
    %v1466 = vld [vmem:[%s1465] ss:$0 sm:$0xff]
    %v1467 = vmul.f32 %v1464, %v1464
    %1468 = vadd.xlane.f32.xlu0 %v1467
    %v1469 = vpop.xlane.xlu0 %1468
    %v1470 = vsub.f32 %v1466, %v1469
    %v1471 = vrsqrt.pop %v1470
    %v1472 = vmul.f32 %v1471, %v1470
    %v1473 = vmul.f32 %v1472, %v1471
    %v1474 = vmul.f32 0.5, %v1473
    %v1475 = vsub.f32 1.5, %v1474
    %v1476 = vmul.f32 %v1471, %v1475
    %vm1477 = vweird.f32 %v1470
    %vm1478 = vweird.f32 %v1471
    %vm1479 = vmor %vm1477, %vm1478
    %v1480 = vsel %vm1479, %v1471, %v1476
    %s1481 = scalar_lea.vmem [#allocation0], 24
    %v1482 = vld [vmem:[%s1481] sm:$0xff]
    %s1483 = scalar_lea.vmem [#allocation1], 24
    %v1484 = vld [vmem:[%s1483] sm:$0xff]
    %v1485 = vmul.f32 %v1484, %v1464
    %1486 = vadd.xlane.f32.xlu0 %v1485
    %v1487 = vpop.xlane.xlu0 %1486
    %v1488 = vsub.f32 %v1482, %v1487
    %v1489 = vmul.f32 %v1488, %v1480
    %v1490 = vsel %vm1462, %v1489, 0.0
    %v1491 = vadd.f32 %v1484, %v1490
    %s1492 = scalar_lea.vmem [#allocation1], 24
    %1493 = vst [vmem:[%s1492] sm:$0xff] %v1491
    %vm1494 = vcmask 212168
    %s1495 = scalar_lea.vmem [#allocation1], 25
    %v1496 = vld [vmem:[%s1495] ss:$0 sm:$0xff]
    %s1497 = scalar_lea.vmem [#allocation0], 25
    %v1498 = vld [vmem:[%s1497] ss:$0 sm:$0xff]
    %v1499 = vmul.f32 %v1496, %v1496
    %1500 = vadd.xlane.f32.xlu0 %v1499
    %v1501 = vpop.xlane.xlu0 %1500
    %v1502 = vsub.f32 %v1498, %v1501
    %v1503 = vrsqrt.pop %v1502
    %v1504 = vmul.f32 %v1503, %v1502
    %v1505 = vmul.f32 %v1504, %v1503
    %v1506 = vmul.f32 0.5, %v1505
    %v1507 = vsub.f32 1.5, %v1506
    %v1508 = vmul.f32 %v1503, %v1507
    %vm1509 = vweird.f32 %v1502
    %vm1510 = vweird.f32 %v1503
    %vm1511 = vmor %vm1509, %vm1510
    %v1512 = vsel %vm1511, %v1503, %v1508
    %s1513 = scalar_lea.vmem [#allocation0], 24
    %v1514 = vld [vmem:[%s1513] sm:$0xff]
    %s1515 = scalar_lea.vmem [#allocation1], 24
    %v1516 = vld [vmem:[%s1515] sm:$0xff]
    %v1517 = vmul.f32 %v1516, %v1496
    %1518 = vadd.xlane.f32.xlu0 %v1517
    %v1519 = vpop.xlane.xlu0 %1518
    %v1520 = vsub.f32 %v1514, %v1519
    %v1521 = vmul.f32 %v1520, %v1512
    %vm1522 = vcmask 1047553
    %vm1523 = vmand %vm1494, %vm1522
    %v1524 = vsel %vm1523, %v1521, 0.0
    %v1525 = vadd.f32 %v1516, %v1524
    %s1526 = scalar_lea.vmem [#allocation1], 24
    %1527 = vst [vmem:[%s1526] sm:$0xff] %v1525
    %vm1528 = vcmask 220368
    %s1529 = scalar_lea.vmem [#allocation1], 26
    %v1530 = vld [vmem:[%s1529] ss:$0 sm:$0xff]
    %s1531 = scalar_lea.vmem [#allocation0], 26
    %v1532 = vld [vmem:[%s1531] ss:$0 sm:$0xff]
    %v1533 = vmul.f32 %v1530, %v1530
    %1534 = vadd.xlane.f32.xlu0 %v1533
    %v1535 = vpop.xlane.xlu0 %1534
    %v1536 = vsub.f32 %v1532, %v1535
    %v1537 = vrsqrt.pop %v1536
    %v1538 = vmul.f32 %v1537, %v1536
    %v1539 = vmul.f32 %v1538, %v1537
    %v1540 = vmul.f32 0.5, %v1539
    %v1541 = vsub.f32 1.5, %v1540
    %v1542 = vmul.f32 %v1537, %v1541
    %vm1543 = vweird.f32 %v1536
    %vm1544 = vweird.f32 %v1537
    %vm1545 = vmor %vm1543, %vm1544
    %v1546 = vsel %vm1545, %v1537, %v1542
    %s1547 = scalar_lea.vmem [#allocation0], 24
    %v1548 = vld [vmem:[%s1547] sm:$0xff]
    %s1549 = scalar_lea.vmem [#allocation1], 24
    %v1550 = vld [vmem:[%s1549] sm:$0xff]
    %v1551 = vmul.f32 %v1550, %v1530
    %1552 = vadd.xlane.f32.xlu0 %v1551
    %v1553 = vpop.xlane.xlu0 %1552
    %v1554 = vsub.f32 %v1548, %v1553
    %v1555 = vmul.f32 %v1554, %v1546
    %vm1556 = vcmask 1047554
    %vm1557 = vmand %vm1528, %vm1556
    %v1558 = vsel %vm1557, %v1555, 0.0
    %v1559 = vadd.f32 %v1550, %v1558
    %s1560 = scalar_lea.vmem [#allocation1], 24
    %1561 = vst [vmem:[%s1560] sm:$0xff] %v1559
    %vm1562 = vcmask 228568
    %s1563 = scalar_lea.vmem [#allocation1], 27
    %v1564 = vld [vmem:[%s1563] ss:$0 sm:$0xff]
    %s1565 = scalar_lea.vmem [#allocation0], 27
    %v1566 = vld [vmem:[%s1565] ss:$0 sm:$0xff]
    %v1567 = vmul.f32 %v1564, %v1564
    %1568 = vadd.xlane.f32.xlu0 %v1567
    %v1569 = vpop.xlane.xlu0 %1568
    %v1570 = vsub.f32 %v1566, %v1569
    %v1571 = vrsqrt.pop %v1570
    %v1572 = vmul.f32 %v1571, %v1570
    %v1573 = vmul.f32 %v1572, %v1571
    %v1574 = vmul.f32 0.5, %v1573
    %v1575 = vsub.f32 1.5, %v1574
    %v1576 = vmul.f32 %v1571, %v1575
    %vm1577 = vweird.f32 %v1570
    %vm1578 = vweird.f32 %v1571
    %vm1579 = vmor %vm1577, %vm1578
    %v1580 = vsel %vm1579, %v1571, %v1576
    %s1581 = scalar_lea.vmem [#allocation0], 24
    %v1582 = vld [vmem:[%s1581] sm:$0xff]
    %s1583 = scalar_lea.vmem [#allocation1], 24
    %v1584 = vld [vmem:[%s1583] sm:$0xff]
    %v1585 = vmul.f32 %v1584, %v1564
    %1586 = vadd.xlane.f32.xlu0 %v1585
    %v1587 = vpop.xlane.xlu0 %1586
    %v1588 = vsub.f32 %v1582, %v1587
    %v1589 = vmul.f32 %v1588, %v1580
    %vm1590 = vcmask 1047555
    %vm1591 = vmand %vm1562, %vm1590
    %v1592 = vsel %vm1591, %v1589, 0.0
    %v1593 = vadd.f32 %v1584, %v1592
    %s1594 = scalar_lea.vmem [#allocation1], 24
    %1595 = vst [vmem:[%s1594] sm:$0xff] %v1593
    %vm1596 = vcmask 236768
    %s1597 = scalar_lea.vmem [#allocation1], 28
    %v1598 = vld [vmem:[%s1597] ss:$0 sm:$0xff]
    %s1599 = scalar_lea.vmem [#allocation0], 28
    %v1600 = vld [vmem:[%s1599] ss:$0 sm:$0xff]
    %v1601 = vmul.f32 %v1598, %v1598
    %1602 = vadd.xlane.f32.xlu0 %v1601
    %v1603 = vpop.xlane.xlu0 %1602
    %v1604 = vsub.f32 %v1600, %v1603
    %v1605 = vrsqrt.pop %v1604
    %v1606 = vmul.f32 %v1605, %v1604
    %v1607 = vmul.f32 %v1606, %v1605
    %v1608 = vmul.f32 0.5, %v1607
    %v1609 = vsub.f32 1.5, %v1608
    %v1610 = vmul.f32 %v1605, %v1609
    %vm1611 = vweird.f32 %v1604
    %vm1612 = vweird.f32 %v1605
    %vm1613 = vmor %vm1611, %vm1612
    %v1614 = vsel %vm1613, %v1605, %v1610
    %s1615 = scalar_lea.vmem [#allocation0], 24
    %v1616 = vld [vmem:[%s1615] sm:$0xff]
    %s1617 = scalar_lea.vmem [#allocation1], 24
    %v1618 = vld [vmem:[%s1617] sm:$0xff]
    %v1619 = vmul.f32 %v1618, %v1598
    %1620 = vadd.xlane.f32.xlu0 %v1619
    %v1621 = vpop.xlane.xlu0 %1620
    %v1622 = vsub.f32 %v1616, %v1621
    %v1623 = vmul.f32 %v1622, %v1614
    %vm1624 = vcmask 1047556
    %vm1625 = vmand %vm1596, %vm1624
    %v1626 = vsel %vm1625, %v1623, 0.0
    %v1627 = vadd.f32 %v1618, %v1626
    %s1628 = scalar_lea.vmem [#allocation1], 24
    %1629 = vst [vmem:[%s1628] sm:$0xff] %v1627
    %vm1630 = vcmask 244968
    %s1631 = scalar_lea.vmem [#allocation1], 29
    %v1632 = vld [vmem:[%s1631] ss:$0 sm:$0xff]
    %s1633 = scalar_lea.vmem [#allocation0], 29
    %v1634 = vld [vmem:[%s1633] ss:$0 sm:$0xff]
    %v1635 = vmul.f32 %v1632, %v1632
    %1636 = vadd.xlane.f32.xlu0 %v1635
    %v1637 = vpop.xlane.xlu0 %1636
    %v1638 = vsub.f32 %v1634, %v1637
    %v1639 = vrsqrt.pop %v1638
    %v1640 = vmul.f32 %v1639, %v1638
    %v1641 = vmul.f32 %v1640, %v1639
    %v1642 = vmul.f32 0.5, %v1641
    %v1643 = vsub.f32 1.5, %v1642
    %v1644 = vmul.f32 %v1639, %v1643
    %vm1645 = vweird.f32 %v1638
    %vm1646 = vweird.f32 %v1639
    %vm1647 = vmor %vm1645, %vm1646
    %v1648 = vsel %vm1647, %v1639, %v1644
    %s1649 = scalar_lea.vmem [#allocation0], 24
    %v1650 = vld [vmem:[%s1649] sm:$0xff]
    %s1651 = scalar_lea.vmem [#allocation1], 24
    %v1652 = vld [vmem:[%s1651] sm:$0xff]
    %v1653 = vmul.f32 %v1652, %v1632
    %1654 = vadd.xlane.f32.xlu0 %v1653
    %v1655 = vpop.xlane.xlu0 %1654
    %v1656 = vsub.f32 %v1650, %v1655
    %v1657 = vmul.f32 %v1656, %v1648
    %vm1658 = vcmask 1047557
    %vm1659 = vmand %vm1630, %vm1658
    %v1660 = vsel %vm1659, %v1657, 0.0
    %v1661 = vadd.f32 %v1652, %v1660
    %s1662 = scalar_lea.vmem [#allocation1], 24
    %1663 = vst [vmem:[%s1662] sm:$0xff] %v1661
    %vm1664 = vcmask 253168
    %s1665 = scalar_lea.vmem [#allocation1], 30
    %v1666 = vld [vmem:[%s1665] ss:$0 sm:$0xff]
    %s1667 = scalar_lea.vmem [#allocation0], 30
    %v1668 = vld [vmem:[%s1667] ss:$0 sm:$0xff]
    %v1669 = vmul.f32 %v1666, %v1666
    %1670 = vadd.xlane.f32.xlu0 %v1669
    %v1671 = vpop.xlane.xlu0 %1670
    %v1672 = vsub.f32 %v1668, %v1671
    %v1673 = vrsqrt.pop %v1672
    %v1674 = vmul.f32 %v1673, %v1672
    %v1675 = vmul.f32 %v1674, %v1673
    %v1676 = vmul.f32 0.5, %v1675
    %v1677 = vsub.f32 1.5, %v1676
    %v1678 = vmul.f32 %v1673, %v1677
    %vm1679 = vweird.f32 %v1672
    %vm1680 = vweird.f32 %v1673
    %vm1681 = vmor %vm1679, %vm1680
    %v1682 = vsel %vm1681, %v1673, %v1678
    %s1683 = scalar_lea.vmem [#allocation0], 24
    %v1684 = vld [vmem:[%s1683] sm:$0xff]
    %s1685 = scalar_lea.vmem [#allocation1], 24
    %v1686 = vld [vmem:[%s1685] sm:$0xff]
    %v1687 = vmul.f32 %v1686, %v1666
    %1688 = vadd.xlane.f32.xlu0 %v1687
    %v1689 = vpop.xlane.xlu0 %1688
    %v1690 = vsub.f32 %v1684, %v1689
    %v1691 = vmul.f32 %v1690, %v1682
    %vm1692 = vcmask 1047558
    %vm1693 = vmand %vm1664, %vm1692
    %v1694 = vsel %vm1693, %v1691, 0.0
    %v1695 = vadd.f32 %v1686, %v1694
    %s1696 = scalar_lea.vmem [#allocation1], 24
    %1697 = vst [vmem:[%s1696] sm:$0xff] %v1695
    %vm1698 = vcmask 261368
    %s1699 = scalar_lea.vmem [#allocation1], 31
    %v1700 = vld [vmem:[%s1699] ss:$0 sm:$0xff]
    %s1701 = scalar_lea.vmem [#allocation0], 31
    %v1702 = vld [vmem:[%s1701] ss:$0 sm:$0xff]
    %v1703 = vmul.f32 %v1700, %v1700
    %1704 = vadd.xlane.f32.xlu0 %v1703
    %v1705 = vpop.xlane.xlu0 %1704
    %v1706 = vsub.f32 %v1702, %v1705
    %v1707 = vrsqrt.pop %v1706
    %v1708 = vmul.f32 %v1707, %v1706
    %v1709 = vmul.f32 %v1708, %v1707
    %v1710 = vmul.f32 0.5, %v1709
    %v1711 = vsub.f32 1.5, %v1710
    %v1712 = vmul.f32 %v1707, %v1711
    %vm1713 = vweird.f32 %v1706
    %vm1714 = vweird.f32 %v1707
    %vm1715 = vmor %vm1713, %vm1714
    %v1716 = vsel %vm1715, %v1707, %v1712
    %s1717 = scalar_lea.vmem [#allocation0], 24
    %v1718 = vld [vmem:[%s1717] sm:$0xff]
    %s1719 = scalar_lea.vmem [#allocation1], 24
    %v1720 = vld [vmem:[%s1719] sm:$0xff]
    %v1721 = vmul.f32 %v1720, %v1700
    %1722 = vadd.xlane.f32.xlu0 %v1721
    %v1723 = vpop.xlane.xlu0 %1722
    %v1724 = vsub.f32 %v1718, %v1723
    %v1725 = vmul.f32 %v1724, %v1716
    %vm1726 = vcmask 1047559
    %vm1727 = vmand %vm1698, %vm1726
    %v1728 = vsel %vm1727, %v1725, 0.0
    %v1729 = vadd.f32 %v1720, %v1728
    %s1730 = scalar_lea.vmem [#allocation1], 24
    %1731 = vst [vmem:[%s1730] sm:$0xff] %v1729
    // Predicated region
    $region36: #{custom-call.6} parent=1 // pred_check
      _
    $region37: #{custom-call.6} parent=1 // pred_check_branch
      %1733 = sbr.rel (0) target = $region39
    $region38: #{custom-call.6} parent=1 // pred_region
      // Predicated region
      $region40: #{custom-call.6} parent=38 // pred_check
        _
      $region41: #{custom-call.6} parent=38 // pred_check_branch
        %1735 = sbr.rel (0) target = $region43
      $region42: #{custom-call.6} parent=38 // pred_region
        // Predicated region
        $region55: #{custom-call.6} parent=42 // pred_check
          _
        $region56: #{custom-call.6} parent=42 // pred_check_branch
          %1757 = sbr.rel (0) target = $region58
        $region57: #{custom-call.6} parent=42 // pred_region
          loop: start=0, step=1, limit=1
          $region59: #{custom-call.6} parent=57 // loop_pre_header
            _
          $region60: #{custom-call.6} parent=57 // loop_header
            %s1759 = sphi 0, %s1763
            %p1760 = scmp.ge.s32.totalorder %s1759, 1
            %s1764 = sphi [#allocation1], [#allocation1]
            %s1765 = sphi %s1, %s1
          $region61: #{custom-call.6} parent=57 // loop_header_branch
            %1762 = sbr.rel (%p1760) target = $region65
          $region62: #{custom-call.6} parent=57 // loop_body
            %v1766 = vld [vmem:[%s1764] sm:$0xff]
            %1767 = vst [vmem:[%s1765] sm:$0xff] %v1766
            %v1768 = vld [vmem:[%s1764 + $0x8] sm:$0xff]
            %1769 = vst [vmem:[%s1765 + $0x8] sm:$0xff] %v1768
            %v1770 = vld [vmem:[%s1764 + $0x10] sm:$0xff]
            %1771 = vst [vmem:[%s1765 + $0x10] sm:$0xff] %v1770
            %v1772 = vld [vmem:[%s1764 + $0x18] sm:$0xff]
            %1773 = vst [vmem:[%s1765 + $0x18] sm:$0xff] %v1772
          $region63: #{custom-call.6} parent=57 // loop_footer
            %s1763 = sadd.s32 1, %s1759
          $region64: #{custom-call.6} parent=57 // loop_footer_branch
            %1758 = sbr.rel target = $region60
          $region65: #{custom-call.6} parent=57 // loop_exit
            _
        $region58: #{custom-call.6} parent=42 // pred_fallthru
          _
        // Predicated region
        $region66: #{custom-call.6} parent=42 // pred_check
          _
        $region67: #{custom-call.6} parent=42 // pred_check_branch
          %1775 = sbr.rel target = $region69
        $region68: #{custom-call.6} parent=42 // pred_region
          _
        $region69: #{custom-call.6} parent=42 // pred_fallthru
          _
      $region43: #{custom-call.6} parent=38 // pred_fallthru
        _
      // Predicated region
      $region44: #{custom-call.6} parent=38 // pred_check
        _
      $region45: #{custom-call.6} parent=38 // pred_check_branch
        %1737 = sbr.rel target = $region47
      $region46: #{custom-call.6} parent=38 // pred_region
        %s1739 = ssub.s32 256, 1
        loop: start=0, step=1, limit=1
        $region48: #{custom-call.6} parent=46 // loop_pre_header
          _
        $region49: #{custom-call.6} parent=46 // loop_header
          %s1741 = sphi 0, %s1745
          %p1742 = scmp.ge.s32.totalorder %s1741, 1
          %s1746 = sphi [#allocation1], [#allocation1]
          %s1747 = sphi %s1, %s1
        $region50: #{custom-call.6} parent=46 // loop_header_branch
          %1744 = sbr.rel (%p1742) target = $region54
        $region51: #{custom-call.6} parent=46 // loop_body
          %v1748 = vld [vmem:[%s1746] sm:%s1739]
          %1749 = vst [vmem:[%s1747] sm:%s1739] %v1748
          %v1750 = vld [vmem:[%s1746 + $0x8] sm:%s1739]
          %1751 = vst [vmem:[%s1747 + $0x8] sm:%s1739] %v1750
          %v1752 = vld [vmem:[%s1746 + $0x10] sm:%s1739]
          %1753 = vst [vmem:[%s1747 + $0x10] sm:%s1739] %v1752
          %v1754 = vld [vmem:[%s1746 + $0x18] sm:%s1739]
          %1755 = vst [vmem:[%s1747 + $0x18] sm:%s1739] %v1754
        $region52: #{custom-call.6} parent=46 // loop_footer
          %s1745 = sadd.s32 1, %s1741
        $region53: #{custom-call.6} parent=46 // loop_footer_branch
          %1740 = sbr.rel target = $region49
        $region54: #{custom-call.6} parent=46 // loop_exit
          _
      $region47: #{custom-call.6} parent=38 // pred_fallthru
        _
    $region39: #{custom-call.6} parent=1 // pred_fallthru
      _
    %1776 = vnop

// kernel: custom-call.7
$region0: #{custom-call.7}
  %s0 = inlined_call_operand.vmem [shape: f32[1,32,32], index: 0, kind: input, shape index: {}]
  %s1 = inlined_call_operand.vmem [shape: f32[1,32,32], index: 1, kind: output, shape index: {}]
  $region1: #{custom-call.7} parent=0
    #allocation0 [shape = 'u8[16384]{0}', space=vmem, size = 0x4000, scoped, tag = 'operand span for operand 0']
    #allocation1 [shape = 'u8[16384]{0}', space=vmem, size = 0x4000, scoped, tag = 'operand span for operand 1']
    #allocation2 [shape = 'f32[32,32]{1,0}', space=vmem, size = 0x4000, scoped, tag = 'rescaled input a']
    // Predicated region
    $region2: #{custom-call.7} parent=1 // pred_check
      _
    $region3: #{custom-call.7} parent=1 // pred_check_branch
      %3 = sbr.rel (0) target = $region5
    $region4: #{custom-call.7} parent=1 // pred_region
      // Predicated region
      $region6: #{custom-call.7} parent=4 // pred_check
        _
      $region7: #{custom-call.7} parent=4 // pred_check_branch
        %5 = sbr.rel (0) target = $region9
      $region8: #{custom-call.7} parent=4 // pred_region
        // Predicated region
        $region21: #{custom-call.7} parent=8 // pred_check
          _
        $region22: #{custom-call.7} parent=8 // pred_check_branch
          %27 = sbr.rel (0) target = $region24
        $region23: #{custom-call.7} parent=8 // pred_region
          loop: start=0, step=1, limit=1
          $region25: #{custom-call.7} parent=23 // loop_pre_header
            _
          $region26: #{custom-call.7} parent=23 // loop_header
            %s29 = sphi 0, %s33
            %p30 = scmp.ge.s32.totalorder %s29, 1
            %s34 = sphi %s0, %s0
            %s35 = sphi [#allocation0], [#allocation0]
          $region27: #{custom-call.7} parent=23 // loop_header_branch
            %32 = sbr.rel (%p30) target = $region31
          $region28: #{custom-call.7} parent=23 // loop_body
            %v36 = vld [vmem:[%s34] sm:$0xff]
            %37 = vst [vmem:[%s35] sm:$0xff] %v36
            %v38 = vld [vmem:[%s34 + $0x8] sm:$0xff]
            %39 = vst [vmem:[%s35 + $0x8] sm:$0xff] %v38
            %v40 = vld [vmem:[%s34 + $0x10] sm:$0xff]
            %41 = vst [vmem:[%s35 + $0x10] sm:$0xff] %v40
            %v42 = vld [vmem:[%s34 + $0x18] sm:$0xff]
            %43 = vst [vmem:[%s35 + $0x18] sm:$0xff] %v42
          $region29: #{custom-call.7} parent=23 // loop_footer
            %s33 = sadd.s32 1, %s29
          $region30: #{custom-call.7} parent=23 // loop_footer_branch
            %28 = sbr.rel target = $region26
          $region31: #{custom-call.7} parent=23 // loop_exit
            _
        $region24: #{custom-call.7} parent=8 // pred_fallthru
          _
        // Predicated region
        $region32: #{custom-call.7} parent=8 // pred_check
          _
        $region33: #{custom-call.7} parent=8 // pred_check_branch
          %45 = sbr.rel target = $region35
        $region34: #{custom-call.7} parent=8 // pred_region
          _
        $region35: #{custom-call.7} parent=8 // pred_fallthru
          _
      $region9: #{custom-call.7} parent=4 // pred_fallthru
        _
      // Predicated region
      $region10: #{custom-call.7} parent=4 // pred_check
        _
      $region11: #{custom-call.7} parent=4 // pred_check_branch
        %7 = sbr.rel target = $region13
      $region12: #{custom-call.7} parent=4 // pred_region
        %s9 = ssub.s32 256, 1
        loop: start=0, step=1, limit=1
        $region14: #{custom-call.7} parent=12 // loop_pre_header
          _
        $region15: #{custom-call.7} parent=12 // loop_header
          %s11 = sphi 0, %s15
          %p12 = scmp.ge.s32.totalorder %s11, 1
          %s16 = sphi %s0, %s0
          %s17 = sphi [#allocation0], [#allocation0]
        $region16: #{custom-call.7} parent=12 // loop_header_branch
          %14 = sbr.rel (%p12) target = $region20
        $region17: #{custom-call.7} parent=12 // loop_body
          %v18 = vld [vmem:[%s16] sm:%s9]
          %19 = vst [vmem:[%s17] sm:%s9] %v18
          %v20 = vld [vmem:[%s16 + $0x8] sm:%s9]
          %21 = vst [vmem:[%s17 + $0x8] sm:%s9] %v20
          %v22 = vld [vmem:[%s16 + $0x10] sm:%s9]
          %23 = vst [vmem:[%s17 + $0x10] sm:%s9] %v22
          %v24 = vld [vmem:[%s16 + $0x18] sm:%s9]
          %25 = vst [vmem:[%s17 + $0x18] sm:%s9] %v24
        $region18: #{custom-call.7} parent=12 // loop_footer
          %s15 = sadd.s32 1, %s11
        $region19: #{custom-call.7} parent=12 // loop_footer_branch
          %10 = sbr.rel target = $region15
        $region20: #{custom-call.7} parent=12 // loop_exit
          _
      $region13: #{custom-call.7} parent=4 // pred_fallthru
        _
    $region5: #{custom-call.7} parent=1 // pred_fallthru
      _
    %46 = vnop
    %v47 = vlaneseq
    %v48 = vand.u32 %v47, 127
    %vm49 = vcmp.lt.s32.totalorder %v48, 32
    %v50 = vlaneseq
    %v51 = vshrl.u32 %v50, 7
    %vm53 = vcmp.eq.s32.totalorder %v51, %v48
    %v54 = vld [vmem:[#allocation0] sm:$0xff]
    %v55 = vsel %vm53, %v54, 0.0
    %56 = vadd.xlane.f32.xlu0 %v55
    %v57 = vpop.xlane.xlu0 %56
    %vm58 = vcmp.ge.s32.totalorder %v51, %v48
    %vm59 = vmand %vm58, %vm49
    %v60 = vsel %vm59, %v54, 0.0
    %v61 = vrcp.pop %v57
    %v62 = vmul.f32 %v57, %v61
    %v63 = vsub.f32 1.0, %v62
    %v64 = vmul.f32 %v61, %v63
    %v65 = vadd.f32 %v61, %v64
    %vm66 = vweird.f32 %v57
    %vm67 = vweird.f32 %v61
    %vm68 = vmor %vm66, %vm67
    %v69 = vsel %vm68, %v61, %v65
    %v70 = vand.u32 2147483647, %v57
    %vm71 = vcmp.eq.f32.partialorder %v70, 8.507059e+37
    %v72 = vand.u32 %v57, 2147483648
    %v73 = vor.u32 1.1754944e-38, %v72
    %v74 = vsel %vm71, %v73, %v69
    %v75 = vmul.f32 %v60, %v74
    %76 = vst [vmem:[#allocation2] sm:$0xff] %v75
    %s77 = scalar_lea.vmem [#allocation0], 8
    %s78 = scalar_lea.vmem [#allocation2], 8
    %v79 = vlaneseq
    %v80 = vshrl.u32 %v79, 7
    %v81 = vadd.s32 %v80, 8
    %vm82 = vcmp.eq.s32.totalorder %v81, %v48
    %v83 = vld [vmem:[%s77] sm:$0xff]
    %v84 = vsel %vm82, %v83, 0.0
    %85 = vadd.xlane.f32.xlu0 %v84
    %v86 = vpop.xlane.xlu0 %85
    %vm87 = vcmp.ge.s32.totalorder %v81, %v48
    %vm88 = vmand %vm87, %vm49
    %v89 = vsel %vm88, %v83, 0.0
    %v90 = vrcp.pop %v86
    %v91 = vmul.f32 %v86, %v90
    %v92 = vsub.f32 1.0, %v91
    %v93 = vmul.f32 %v90, %v92
    %v94 = vadd.f32 %v90, %v93
    %vm95 = vweird.f32 %v86
    %vm96 = vweird.f32 %v90
    %vm97 = vmor %vm95, %vm96
    %v98 = vsel %vm97, %v90, %v94
    %v99 = vand.u32 2147483647, %v86
    %vm100 = vcmp.eq.f32.partialorder %v99, 8.507059e+37
    %v101 = vand.u32 %v86, 2147483648
    %v102 = vor.u32 1.1754944e-38, %v101
    %v103 = vsel %vm100, %v102, %v98
    %v104 = vmul.f32 %v89, %v103
    %105 = vst [vmem:[%s78] sm:$0xff] %v104
    %s106 = scalar_lea.vmem [#allocation0], 16
    %s107 = scalar_lea.vmem [#allocation2], 16
    %v108 = vlaneseq
    %v109 = vshrl.u32 %v108, 7
    %v110 = vadd.s32 %v109, 16
    %vm111 = vcmp.eq.s32.totalorder %v110, %v48
    %v112 = vld [vmem:[%s106] sm:$0xff]
    %v113 = vsel %vm111, %v112, 0.0
    %114 = vadd.xlane.f32.xlu0 %v113
    %v115 = vpop.xlane.xlu0 %114
    %vm116 = vcmp.ge.s32.totalorder %v110, %v48
    %vm117 = vmand %vm116, %vm49
    %v118 = vsel %vm117, %v112, 0.0
    %v119 = vrcp.pop %v115
    %v120 = vmul.f32 %v115, %v119
    %v121 = vsub.f32 1.0, %v120
    %v122 = vmul.f32 %v119, %v121
    %v123 = vadd.f32 %v119, %v122
    %vm124 = vweird.f32 %v115
    %vm125 = vweird.f32 %v119
    %vm126 = vmor %vm124, %vm125
    %v127 = vsel %vm126, %v119, %v123
    %v128 = vand.u32 2147483647, %v115
    %vm129 = vcmp.eq.f32.partialorder %v128, 8.507059e+37
    %v130 = vand.u32 %v115, 2147483648
    %v131 = vor.u32 1.1754944e-38, %v130
    %v132 = vsel %vm129, %v131, %v127
    %v133 = vmul.f32 %v118, %v132
    %134 = vst [vmem:[%s107] sm:$0xff] %v133
    %s135 = scalar_lea.vmem [#allocation0], 24
    %s136 = scalar_lea.vmem [#allocation2], 24
    %v137 = vlaneseq
    %v138 = vshrl.u32 %v137, 7
    %v139 = vadd.s32 %v138, 24
    %vm140 = vcmp.eq.s32.totalorder %v139, %v48
    %v141 = vld [vmem:[%s135] sm:$0xff]
    %v142 = vsel %vm140, %v141, 0.0
    %143 = vadd.xlane.f32.xlu0 %v142
    %v144 = vpop.xlane.xlu0 %143
    %vm145 = vcmp.ge.s32.totalorder %v139, %v48
    %vm146 = vmand %vm145, %vm49
    %v147 = vsel %vm146, %v141, 0.0
    %v148 = vrcp.pop %v144
    %v149 = vmul.f32 %v144, %v148
    %v150 = vsub.f32 1.0, %v149
    %v151 = vmul.f32 %v148, %v150
    %v152 = vadd.f32 %v148, %v151
    %vm153 = vweird.f32 %v144
    %vm154 = vweird.f32 %v148
    %vm155 = vmor %vm153, %vm154
    %v156 = vsel %vm155, %v148, %v152
    %v157 = vand.u32 2147483647, %v144
    %vm158 = vcmp.eq.f32.partialorder %v157, 8.507059e+37
    %v159 = vand.u32 %v144, 2147483648
    %v160 = vor.u32 1.1754944e-38, %v159
    %v161 = vsel %vm158, %v160, %v156
    %v162 = vmul.f32 %v147, %v161
    %163 = vst [vmem:[%s136] sm:$0xff] %v162
    %v164 = vlaneseq
    %v165 = vand.u32 %v164, 127
    %v166 = vlaneseq
    %v167 = vshrl.u32 %v166, 7
    %vm169 = vcmp.eq.s32.totalorder %v165, %v167
    %v170 = vlaneseq
    %v171 = vand.u32 %v170, 127
    %vm172 = vcmp.eq.s32.totalorder %v171, 0
    %v173 = vsel %vm172, 1.0, -1.0
    %v174 = vsel %vm169, %v173, 0.0
    %v175 = vlaneseq
    %v176 = vand.u32 %v175, 127
    %v177 = vlaneseq
    %v178 = vshrl.u32 %v177, 7
    %v179 = vadd.s32 %v178, 8
    %vm180 = vcmp.eq.s32.totalorder %v176, %v179
    %v181 = vsel %vm180, -1.0, 0.0
    %v182 = vlaneseq
    %v183 = vand.u32 %v182, 127
    %v184 = vlaneseq
    %v185 = vshrl.u32 %v184, 7
    %v186 = vadd.s32 %v185, 16
    %vm187 = vcmp.eq.s32.totalorder %v183, %v186
    %v188 = vsel %vm187, -1.0, 0.0
    %v189 = vlaneseq
    %v190 = vand.u32 %v189, 127
    %v191 = vlaneseq
    %v192 = vshrl.u32 %v191, 7
    %v193 = vadd.s32 %v192, 24
    %vm194 = vcmp.eq.s32.totalorder %v190, %v193
    %v195 = vsel %vm194, -1.0, 0.0
    %s196 = scalar_lea.vmem [#allocation2], 1
    %v197 = vld [vmem:[%s196] ss:$0 sm:$0xff]
    %v198 = vxor.u32 %v197, 2147483648
    %v199 = vlaneseq
    %v200 = vand.u32 %v199, 127
    %vm201 = vcmp.eq.s32.totalorder %v200, 1
    %v202 = vmul.f32 %v198, %v174
    %203 = vadd.xlane.f32.xlu0 %v202
    %v204 = vpop.xlane.xlu0 %203
    %v205 = vsel %vm201, %v204, %v174
    %s206 = scalar_lea.vmem [#allocation2], 2
    %v207 = vld [vmem:[%s206] ss:$0 sm:$0xff]
    %v208 = vxor.u32 %v207, 2147483648
    %v209 = vlaneseq
    %v210 = vand.u32 %v209, 127
    %vm211 = vcmp.eq.s32.totalorder %v210, 2
    %v212 = vmul.f32 %v208, %v205
    %213 = vadd.xlane.f32.xlu0 %v212
    %v214 = vpop.xlane.xlu0 %213
    %v215 = vsel %vm211, %v214, %v205
    %s216 = scalar_lea.vmem [#allocation2], 3
    %v217 = vld [vmem:[%s216] ss:$0 sm:$0xff]
    %v218 = vxor.u32 %v217, 2147483648
    %v219 = vlaneseq
    %v220 = vand.u32 %v219, 127
    %vm221 = vcmp.eq.s32.totalorder %v220, 3
    %v222 = vmul.f32 %v218, %v215
    %223 = vadd.xlane.f32.xlu0 %v222
    %v224 = vpop.xlane.xlu0 %223
    %v225 = vsel %vm221, %v224, %v215
    %s226 = scalar_lea.vmem [#allocation2], 4
    %v227 = vld [vmem:[%s226] ss:$0 sm:$0xff]
    %v228 = vxor.u32 %v227, 2147483648
    %v229 = vlaneseq
    %v230 = vand.u32 %v229, 127
    %vm231 = vcmp.eq.s32.totalorder %v230, 4
    %v232 = vmul.f32 %v228, %v225
    %233 = vadd.xlane.f32.xlu0 %v232
    %v234 = vpop.xlane.xlu0 %233
    %v235 = vsel %vm231, %v234, %v225
    %s236 = scalar_lea.vmem [#allocation2], 5
    %v237 = vld [vmem:[%s236] ss:$0 sm:$0xff]
    %v238 = vxor.u32 %v237, 2147483648
    %v239 = vlaneseq
    %v240 = vand.u32 %v239, 127
    %vm241 = vcmp.eq.s32.totalorder %v240, 5
    %v242 = vmul.f32 %v238, %v235
    %243 = vadd.xlane.f32.xlu0 %v242
    %v244 = vpop.xlane.xlu0 %243
    %v245 = vsel %vm241, %v244, %v235
    %s246 = scalar_lea.vmem [#allocation2], 6
    %v247 = vld [vmem:[%s246] ss:$0 sm:$0xff]
    %v248 = vxor.u32 %v247, 2147483648
    %v249 = vlaneseq
    %v250 = vand.u32 %v249, 127
    %vm251 = vcmp.eq.s32.totalorder %v250, 6
    %v252 = vmul.f32 %v248, %v245
    %253 = vadd.xlane.f32.xlu0 %v252
    %v254 = vpop.xlane.xlu0 %253
    %v255 = vsel %vm251, %v254, %v245
    %s256 = scalar_lea.vmem [#allocation2], 7
    %v257 = vld [vmem:[%s256] ss:$0 sm:$0xff]
    %v258 = vxor.u32 %v257, 2147483648
    %v259 = vlaneseq
    %v260 = vand.u32 %v259, 127
    %vm261 = vcmp.eq.s32.totalorder %v260, 7
    %v262 = vmul.f32 %v258, %v255
    %263 = vadd.xlane.f32.xlu0 %v262
    %v264 = vpop.xlane.xlu0 %263
    %v265 = vsel %vm261, %v264, %v255
    %s266 = scalar_lea.vmem [#allocation2], 8
    %v267 = vld [vmem:[%s266] ss:$0 sm:$0xff]
    %v268 = vxor.u32 %v267, 2147483648
    %v269 = vlaneseq
    %v270 = vand.u32 %v269, 127
    %vm271 = vcmp.eq.s32.totalorder %v270, 8
    %v272 = vmul.f32 %v268, %v265
    %273 = vadd.xlane.f32.xlu0 %v272
    %v274 = vpop.xlane.xlu0 %273
    %v275 = vsel %vm271, %v274, %v265
    %v276 = vmul.f32 %v268, %v181
    %277 = vadd.xlane.f32.xlu0 %v276
    %v278 = vpop.xlane.xlu0 %277
    %v279 = vsel %vm271, %v278, %v181
    %s280 = scalar_lea.vmem [#allocation2], 9
    %v281 = vld [vmem:[%s280] ss:$0 sm:$0xff]
    %v282 = vxor.u32 %v281, 2147483648
    %v283 = vlaneseq
    %v284 = vand.u32 %v283, 127
    %vm285 = vcmp.eq.s32.totalorder %v284, 9
    %v286 = vmul.f32 %v282, %v275
    %287 = vadd.xlane.f32.xlu0 %v286
    %v288 = vpop.xlane.xlu0 %287
    %v289 = vsel %vm285, %v288, %v275
    %v290 = vmul.f32 %v282, %v279
    %291 = vadd.xlane.f32.xlu0 %v290
    %v292 = vpop.xlane.xlu0 %291
    %v293 = vsel %vm285, %v292, %v279
    %s294 = scalar_lea.vmem [#allocation2], 10
    %v295 = vld [vmem:[%s294] ss:$0 sm:$0xff]
    %v296 = vxor.u32 %v295, 2147483648
    %v297 = vlaneseq
    %v298 = vand.u32 %v297, 127
    %vm299 = vcmp.eq.s32.totalorder %v298, 10
    %v300 = vmul.f32 %v296, %v289
    %301 = vadd.xlane.f32.xlu0 %v300
    %v302 = vpop.xlane.xlu0 %301
    %v303 = vsel %vm299, %v302, %v289
    %v304 = vmul.f32 %v296, %v293
    %305 = vadd.xlane.f32.xlu0 %v304
    %v306 = vpop.xlane.xlu0 %305
    %v307 = vsel %vm299, %v306, %v293
    %s308 = scalar_lea.vmem [#allocation2], 11
    %v309 = vld [vmem:[%s308] ss:$0 sm:$0xff]
    %v310 = vxor.u32 %v309, 2147483648
    %v311 = vlaneseq
    %v312 = vand.u32 %v311, 127
    %vm313 = vcmp.eq.s32.totalorder %v312, 11
    %v314 = vmul.f32 %v310, %v303
    %315 = vadd.xlane.f32.xlu0 %v314
    %v316 = vpop.xlane.xlu0 %315
    %v317 = vsel %vm313, %v316, %v303
    %v318 = vmul.f32 %v310, %v307
    %319 = vadd.xlane.f32.xlu0 %v318
    %v320 = vpop.xlane.xlu0 %319
    %v321 = vsel %vm313, %v320, %v307
    %s322 = scalar_lea.vmem [#allocation2], 12
    %v323 = vld [vmem:[%s322] ss:$0 sm:$0xff]
    %v324 = vxor.u32 %v323, 2147483648
    %v325 = vlaneseq
    %v326 = vand.u32 %v325, 127
    %vm327 = vcmp.eq.s32.totalorder %v326, 12
    %v328 = vmul.f32 %v324, %v317
    %329 = vadd.xlane.f32.xlu0 %v328
    %v330 = vpop.xlane.xlu0 %329
    %v331 = vsel %vm327, %v330, %v317
    %v332 = vmul.f32 %v324, %v321
    %333 = vadd.xlane.f32.xlu0 %v332
    %v334 = vpop.xlane.xlu0 %333
    %v335 = vsel %vm327, %v334, %v321
    %s336 = scalar_lea.vmem [#allocation2], 13
    %v337 = vld [vmem:[%s336] ss:$0 sm:$0xff]
    %v338 = vxor.u32 %v337, 2147483648
    %v339 = vlaneseq
    %v340 = vand.u32 %v339, 127
    %vm341 = vcmp.eq.s32.totalorder %v340, 13
    %v342 = vmul.f32 %v338, %v331
    %343 = vadd.xlane.f32.xlu0 %v342
    %v344 = vpop.xlane.xlu0 %343
    %v345 = vsel %vm341, %v344, %v331
    %v346 = vmul.f32 %v338, %v335
    %347 = vadd.xlane.f32.xlu0 %v346
    %v348 = vpop.xlane.xlu0 %347
    %v349 = vsel %vm341, %v348, %v335
    %s350 = scalar_lea.vmem [#allocation2], 14
    %v351 = vld [vmem:[%s350] ss:$0 sm:$0xff]
    %v352 = vxor.u32 %v351, 2147483648
    %v353 = vlaneseq
    %v354 = vand.u32 %v353, 127
    %vm355 = vcmp.eq.s32.totalorder %v354, 14
    %v356 = vmul.f32 %v352, %v345
    %357 = vadd.xlane.f32.xlu0 %v356
    %v358 = vpop.xlane.xlu0 %357
    %v359 = vsel %vm355, %v358, %v345
    %v360 = vmul.f32 %v352, %v349
    %361 = vadd.xlane.f32.xlu0 %v360
    %v362 = vpop.xlane.xlu0 %361
    %v363 = vsel %vm355, %v362, %v349
    %s364 = scalar_lea.vmem [#allocation2], 15
    %v365 = vld [vmem:[%s364] ss:$0 sm:$0xff]
    %v366 = vxor.u32 %v365, 2147483648
    %v367 = vlaneseq
    %v368 = vand.u32 %v367, 127
    %vm369 = vcmp.eq.s32.totalorder %v368, 15
    %v370 = vmul.f32 %v366, %v359
    %371 = vadd.xlane.f32.xlu0 %v370
    %v372 = vpop.xlane.xlu0 %371
    %v373 = vsel %vm369, %v372, %v359
    %v374 = vmul.f32 %v366, %v363
    %375 = vadd.xlane.f32.xlu0 %v374
    %v376 = vpop.xlane.xlu0 %375
    %v377 = vsel %vm369, %v376, %v363
    %s378 = scalar_lea.vmem [#allocation2], 16
    %v379 = vld [vmem:[%s378] ss:$0 sm:$0xff]
    %v380 = vxor.u32 %v379, 2147483648
    %v381 = vlaneseq
    %v382 = vand.u32 %v381, 127
    %vm383 = vcmp.eq.s32.totalorder %v382, 16
    %v384 = vmul.f32 %v380, %v373
    %385 = vadd.xlane.f32.xlu0 %v384
    %v386 = vpop.xlane.xlu0 %385
    %v387 = vsel %vm383, %v386, %v373
    %v388 = vmul.f32 %v380, %v377
    %389 = vadd.xlane.f32.xlu0 %v388
    %v390 = vpop.xlane.xlu0 %389
    %v391 = vsel %vm383, %v390, %v377
    %v392 = vmul.f32 %v380, %v188
    %393 = vadd.xlane.f32.xlu0 %v392
    %v394 = vpop.xlane.xlu0 %393
    %v395 = vsel %vm383, %v394, %v188
    %s396 = scalar_lea.vmem [#allocation2], 17
    %v397 = vld [vmem:[%s396] ss:$0 sm:$0xff]
    %v398 = vxor.u32 %v397, 2147483648
    %v399 = vlaneseq
    %v400 = vand.u32 %v399, 127
    %vm401 = vcmp.eq.s32.totalorder %v400, 17
    %v402 = vmul.f32 %v398, %v387
    %403 = vadd.xlane.f32.xlu0 %v402
    %v404 = vpop.xlane.xlu0 %403
    %v405 = vsel %vm401, %v404, %v387
    %v406 = vmul.f32 %v398, %v391
    %407 = vadd.xlane.f32.xlu0 %v406
    %v408 = vpop.xlane.xlu0 %407
    %v409 = vsel %vm401, %v408, %v391
    %v410 = vmul.f32 %v398, %v395
    %411 = vadd.xlane.f32.xlu0 %v410
    %v412 = vpop.xlane.xlu0 %411
    %v413 = vsel %vm401, %v412, %v395
    %s414 = scalar_lea.vmem [#allocation2], 18
    %v415 = vld [vmem:[%s414] ss:$0 sm:$0xff]
    %v416 = vxor.u32 %v415, 2147483648
    %v417 = vlaneseq
    %v418 = vand.u32 %v417, 127
    %vm419 = vcmp.eq.s32.totalorder %v418, 18
    %v420 = vmul.f32 %v416, %v405
    %421 = vadd.xlane.f32.xlu0 %v420
    %v422 = vpop.xlane.xlu0 %421
    %v423 = vsel %vm419, %v422, %v405
    %v424 = vmul.f32 %v416, %v409
    %425 = vadd.xlane.f32.xlu0 %v424
    %v426 = vpop.xlane.xlu0 %425
    %v427 = vsel %vm419, %v426, %v409
    %v428 = vmul.f32 %v416, %v413
    %429 = vadd.xlane.f32.xlu0 %v428
    %v430 = vpop.xlane.xlu0 %429
    %v431 = vsel %vm419, %v430, %v413
    %s432 = scalar_lea.vmem [#allocation2], 19
    %v433 = vld [vmem:[%s432] ss:$0 sm:$0xff]
    %v434 = vxor.u32 %v433, 2147483648
    %v435 = vlaneseq
    %v436 = vand.u32 %v435, 127
    %vm437 = vcmp.eq.s32.totalorder %v436, 19
    %v438 = vmul.f32 %v434, %v423
    %439 = vadd.xlane.f32.xlu0 %v438
    %v440 = vpop.xlane.xlu0 %439
    %v441 = vsel %vm437, %v440, %v423
    %v442 = vmul.f32 %v434, %v427
    %443 = vadd.xlane.f32.xlu0 %v442
    %v444 = vpop.xlane.xlu0 %443
    %v445 = vsel %vm437, %v444, %v427
    %v446 = vmul.f32 %v434, %v431
    %447 = vadd.xlane.f32.xlu0 %v446
    %v448 = vpop.xlane.xlu0 %447
    %v449 = vsel %vm437, %v448, %v431
    %s450 = scalar_lea.vmem [#allocation2], 20
    %v451 = vld [vmem:[%s450] ss:$0 sm:$0xff]
    %v452 = vxor.u32 %v451, 2147483648
    %v453 = vlaneseq
    %v454 = vand.u32 %v453, 127
    %vm455 = vcmp.eq.s32.totalorder %v454, 20
    %v456 = vmul.f32 %v452, %v441
    %457 = vadd.xlane.f32.xlu0 %v456
    %v458 = vpop.xlane.xlu0 %457
    %v459 = vsel %vm455, %v458, %v441
    %v460 = vmul.f32 %v452, %v445
    %461 = vadd.xlane.f32.xlu0 %v460
    %v462 = vpop.xlane.xlu0 %461
    %v463 = vsel %vm455, %v462, %v445
    %v464 = vmul.f32 %v452, %v449
    %465 = vadd.xlane.f32.xlu0 %v464
    %v466 = vpop.xlane.xlu0 %465
    %v467 = vsel %vm455, %v466, %v449
    %s468 = scalar_lea.vmem [#allocation2], 21
    %v469 = vld [vmem:[%s468] ss:$0 sm:$0xff]
    %v470 = vxor.u32 %v469, 2147483648
    %v471 = vlaneseq
    %v472 = vand.u32 %v471, 127
    %vm473 = vcmp.eq.s32.totalorder %v472, 21
    %v474 = vmul.f32 %v470, %v459
    %475 = vadd.xlane.f32.xlu0 %v474
    %v476 = vpop.xlane.xlu0 %475
    %v477 = vsel %vm473, %v476, %v459
    %v478 = vmul.f32 %v470, %v463
    %479 = vadd.xlane.f32.xlu0 %v478
    %v480 = vpop.xlane.xlu0 %479
    %v481 = vsel %vm473, %v480, %v463
    %v482 = vmul.f32 %v470, %v467
    %483 = vadd.xlane.f32.xlu0 %v482
    %v484 = vpop.xlane.xlu0 %483
    %v485 = vsel %vm473, %v484, %v467
    %s486 = scalar_lea.vmem [#allocation2], 22
    %v487 = vld [vmem:[%s486] ss:$0 sm:$0xff]
    %v488 = vxor.u32 %v487, 2147483648
    %v489 = vlaneseq
    %v490 = vand.u32 %v489, 127
    %vm491 = vcmp.eq.s32.totalorder %v490, 22
    %v492 = vmul.f32 %v488, %v477
    %493 = vadd.xlane.f32.xlu0 %v492
    %v494 = vpop.xlane.xlu0 %493
    %v495 = vsel %vm491, %v494, %v477
    %v496 = vmul.f32 %v488, %v481
    %497 = vadd.xlane.f32.xlu0 %v496
    %v498 = vpop.xlane.xlu0 %497
    %v499 = vsel %vm491, %v498, %v481
    %v500 = vmul.f32 %v488, %v485
    %501 = vadd.xlane.f32.xlu0 %v500
    %v502 = vpop.xlane.xlu0 %501
    %v503 = vsel %vm491, %v502, %v485
    %s504 = scalar_lea.vmem [#allocation2], 23
    %v505 = vld [vmem:[%s504] ss:$0 sm:$0xff]
    %v506 = vxor.u32 %v505, 2147483648
    %v507 = vlaneseq
    %v508 = vand.u32 %v507, 127
    %vm509 = vcmp.eq.s32.totalorder %v508, 23
    %v510 = vmul.f32 %v506, %v495
    %511 = vadd.xlane.f32.xlu0 %v510
    %v512 = vpop.xlane.xlu0 %511
    %v513 = vsel %vm509, %v512, %v495
    %v514 = vmul.f32 %v506, %v499
    %515 = vadd.xlane.f32.xlu0 %v514
    %v516 = vpop.xlane.xlu0 %515
    %v517 = vsel %vm509, %v516, %v499
    %v518 = vmul.f32 %v506, %v503
    %519 = vadd.xlane.f32.xlu0 %v518
    %v520 = vpop.xlane.xlu0 %519
    %v521 = vsel %vm509, %v520, %v503
    %s522 = scalar_lea.vmem [#allocation2], 24
    %v523 = vld [vmem:[%s522] ss:$0 sm:$0xff]
    %v524 = vxor.u32 %v523, 2147483648
    %v525 = vlaneseq
    %v526 = vand.u32 %v525, 127
    %vm527 = vcmp.eq.s32.totalorder %v526, 24
    %v528 = vmul.f32 %v524, %v513
    %529 = vadd.xlane.f32.xlu0 %v528
    %v530 = vpop.xlane.xlu0 %529
    %v531 = vsel %vm527, %v530, %v513
    %v532 = vmul.f32 %v524, %v517
    %533 = vadd.xlane.f32.xlu0 %v532
    %v534 = vpop.xlane.xlu0 %533
    %v535 = vsel %vm527, %v534, %v517
    %v536 = vmul.f32 %v524, %v521
    %537 = vadd.xlane.f32.xlu0 %v536
    %v538 = vpop.xlane.xlu0 %537
    %v539 = vsel %vm527, %v538, %v521
    %v540 = vmul.f32 %v524, %v195
    %541 = vadd.xlane.f32.xlu0 %v540
    %v542 = vpop.xlane.xlu0 %541
    %v543 = vsel %vm527, %v542, %v195
    %s544 = scalar_lea.vmem [#allocation2], 25
    %v545 = vld [vmem:[%s544] ss:$0 sm:$0xff]
    %v546 = vxor.u32 %v545, 2147483648
    %v547 = vlaneseq
    %v548 = vand.u32 %v547, 127
    %vm549 = vcmp.eq.s32.totalorder %v548, 25
    %v550 = vmul.f32 %v546, %v531
    %551 = vadd.xlane.f32.xlu0 %v550
    %v552 = vpop.xlane.xlu0 %551
    %v553 = vsel %vm549, %v552, %v531
    %v554 = vmul.f32 %v546, %v535
    %555 = vadd.xlane.f32.xlu0 %v554
    %v556 = vpop.xlane.xlu0 %555
    %v557 = vsel %vm549, %v556, %v535
    %v558 = vmul.f32 %v546, %v539
    %559 = vadd.xlane.f32.xlu0 %v558
    %v560 = vpop.xlane.xlu0 %559
    %v561 = vsel %vm549, %v560, %v539
    %v562 = vmul.f32 %v546, %v543
    %563 = vadd.xlane.f32.xlu0 %v562
    %v564 = vpop.xlane.xlu0 %563
    %v565 = vsel %vm549, %v564, %v543
    %s566 = scalar_lea.vmem [#allocation2], 26
    %v567 = vld [vmem:[%s566] ss:$0 sm:$0xff]
    %v568 = vxor.u32 %v567, 2147483648
    %v569 = vlaneseq
    %v570 = vand.u32 %v569, 127
    %vm571 = vcmp.eq.s32.totalorder %v570, 26
    %v572 = vmul.f32 %v568, %v553
    %573 = vadd.xlane.f32.xlu0 %v572
    %v574 = vpop.xlane.xlu0 %573
    %v575 = vsel %vm571, %v574, %v553
    %v576 = vmul.f32 %v568, %v557
    %577 = vadd.xlane.f32.xlu0 %v576
    %v578 = vpop.xlane.xlu0 %577
    %v579 = vsel %vm571, %v578, %v557
    %v580 = vmul.f32 %v568, %v561
    %581 = vadd.xlane.f32.xlu0 %v580
    %v582 = vpop.xlane.xlu0 %581
    %v583 = vsel %vm571, %v582, %v561
    %v584 = vmul.f32 %v568, %v565
    %585 = vadd.xlane.f32.xlu0 %v584
    %v586 = vpop.xlane.xlu0 %585
    %v587 = vsel %vm571, %v586, %v565
    %s588 = scalar_lea.vmem [#allocation2], 27
    %v589 = vld [vmem:[%s588] ss:$0 sm:$0xff]
    %v590 = vxor.u32 %v589, 2147483648
    %v591 = vlaneseq
    %v592 = vand.u32 %v591, 127
    %vm593 = vcmp.eq.s32.totalorder %v592, 27
    %v594 = vmul.f32 %v590, %v575
    %595 = vadd.xlane.f32.xlu0 %v594
    %v596 = vpop.xlane.xlu0 %595
    %v597 = vsel %vm593, %v596, %v575
    %v598 = vmul.f32 %v590, %v579
    %599 = vadd.xlane.f32.xlu0 %v598
    %v600 = vpop.xlane.xlu0 %599
    %v601 = vsel %vm593, %v600, %v579
    %v602 = vmul.f32 %v590, %v583
    %603 = vadd.xlane.f32.xlu0 %v602
    %v604 = vpop.xlane.xlu0 %603
    %v605 = vsel %vm593, %v604, %v583
    %v606 = vmul.f32 %v590, %v587
    %607 = vadd.xlane.f32.xlu0 %v606
    %v608 = vpop.xlane.xlu0 %607
    %v609 = vsel %vm593, %v608, %v587
    %s610 = scalar_lea.vmem [#allocation2], 28
    %v611 = vld [vmem:[%s610] ss:$0 sm:$0xff]
    %v612 = vxor.u32 %v611, 2147483648
    %v613 = vlaneseq
    %v614 = vand.u32 %v613, 127
    %vm615 = vcmp.eq.s32.totalorder %v614, 28
    %v616 = vmul.f32 %v612, %v597
    %617 = vadd.xlane.f32.xlu0 %v616
    %v618 = vpop.xlane.xlu0 %617
    %v619 = vsel %vm615, %v618, %v597
    %v620 = vmul.f32 %v612, %v601
    %621 = vadd.xlane.f32.xlu0 %v620
    %v622 = vpop.xlane.xlu0 %621
    %v623 = vsel %vm615, %v622, %v601
    %v624 = vmul.f32 %v612, %v605
    %625 = vadd.xlane.f32.xlu0 %v624
    %v626 = vpop.xlane.xlu0 %625
    %v627 = vsel %vm615, %v626, %v605
    %v628 = vmul.f32 %v612, %v609
    %629 = vadd.xlane.f32.xlu0 %v628
    %v630 = vpop.xlane.xlu0 %629
    %v631 = vsel %vm615, %v630, %v609
    %s632 = scalar_lea.vmem [#allocation2], 29
    %v633 = vld [vmem:[%s632] ss:$0 sm:$0xff]
    %v634 = vxor.u32 %v633, 2147483648
    %v635 = vlaneseq
    %v636 = vand.u32 %v635, 127
    %vm637 = vcmp.eq.s32.totalorder %v636, 29
    %v638 = vmul.f32 %v634, %v619
    %639 = vadd.xlane.f32.xlu0 %v638
    %v640 = vpop.xlane.xlu0 %639
    %v641 = vsel %vm637, %v640, %v619
    %v642 = vmul.f32 %v634, %v623
    %643 = vadd.xlane.f32.xlu0 %v642
    %v644 = vpop.xlane.xlu0 %643
    %v645 = vsel %vm637, %v644, %v623
    %v646 = vmul.f32 %v634, %v627
    %647 = vadd.xlane.f32.xlu0 %v646
    %v648 = vpop.xlane.xlu0 %647
    %v649 = vsel %vm637, %v648, %v627
    %v650 = vmul.f32 %v634, %v631
    %651 = vadd.xlane.f32.xlu0 %v650
    %v652 = vpop.xlane.xlu0 %651
    %v653 = vsel %vm637, %v652, %v631
    %s654 = scalar_lea.vmem [#allocation2], 30
    %v655 = vld [vmem:[%s654] ss:$0 sm:$0xff]
    %v656 = vxor.u32 %v655, 2147483648
    %v657 = vlaneseq
    %v658 = vand.u32 %v657, 127
    %vm659 = vcmp.eq.s32.totalorder %v658, 30
    %v660 = vmul.f32 %v656, %v641
    %661 = vadd.xlane.f32.xlu0 %v660
    %v662 = vpop.xlane.xlu0 %661
    %v663 = vsel %vm659, %v662, %v641
    %v664 = vmul.f32 %v656, %v645
    %665 = vadd.xlane.f32.xlu0 %v664
    %v666 = vpop.xlane.xlu0 %665
    %v667 = vsel %vm659, %v666, %v645
    %v668 = vmul.f32 %v656, %v649
    %669 = vadd.xlane.f32.xlu0 %v668
    %v670 = vpop.xlane.xlu0 %669
    %v671 = vsel %vm659, %v670, %v649
    %v672 = vmul.f32 %v656, %v653
    %673 = vadd.xlane.f32.xlu0 %v672
    %v674 = vpop.xlane.xlu0 %673
    %v675 = vsel %vm659, %v674, %v653
    %s676 = scalar_lea.vmem [#allocation2], 31
    %v677 = vld [vmem:[%s676] ss:$0 sm:$0xff]
    %v678 = vxor.u32 %v677, 2147483648
    %v679 = vlaneseq
    %v680 = vand.u32 %v679, 127
    %vm681 = vcmp.eq.s32.totalorder %v680, 31
    %v682 = vmul.f32 %v678, %v663
    %683 = vadd.xlane.f32.xlu0 %v682
    %v684 = vpop.xlane.xlu0 %683
    %v685 = vsel %vm681, %v684, %v663
    %v686 = vmul.f32 %v678, %v667
    %687 = vadd.xlane.f32.xlu0 %v686
    %v688 = vpop.xlane.xlu0 %687
    %v689 = vsel %vm681, %v688, %v667
    %v690 = vmul.f32 %v678, %v671
    %691 = vadd.xlane.f32.xlu0 %v690
    %v692 = vpop.xlane.xlu0 %691
    %v693 = vsel %vm681, %v692, %v671
    %v694 = vmul.f32 %v678, %v675
    %695 = vadd.xlane.f32.xlu0 %v694
    %v696 = vpop.xlane.xlu0 %695
    %v697 = vsel %vm681, %v696, %v675
    %v698 = vrcp.pop %v57
    %v699 = vmul.f32 %v57, %v698
    %v700 = vsub.f32 1.0, %v699
    %v701 = vmul.f32 %v698, %v700
    %v702 = vadd.f32 %v698, %v701
    %vm703 = vweird.f32 %v57
    %vm704 = vweird.f32 %v698
    %vm705 = vmor %vm703, %vm704
    %v706 = vsel %vm705, %v698, %v702
    %v707 = vand.u32 2147483647, %v57
    %vm708 = vcmp.eq.f32.partialorder %v707, 8.507059e+37
    %v709 = vand.u32 %v57, 2147483648
    %v710 = vor.u32 1.1754944e-38, %v709
    %v711 = vsel %vm708, %v710, %v706
    %v712 = vmul.f32 %v685, %v711
    %vm713 = vweird.f32 %v57
    %v714 = vsel %vm713, %v685, %v712
    %715 = vst [vmem:[#allocation1] sm:$0xff] %v714
    %v716 = vrcp.pop %v86
    %v717 = vmul.f32 %v86, %v716
    %v718 = vsub.f32 1.0, %v717
    %v719 = vmul.f32 %v716, %v718
    %v720 = vadd.f32 %v716, %v719
    %vm721 = vweird.f32 %v86
    %vm722 = vweird.f32 %v716
    %vm723 = vmor %vm721, %vm722
    %v724 = vsel %vm723, %v716, %v720
    %v725 = vand.u32 2147483647, %v86
    %vm726 = vcmp.eq.f32.partialorder %v725, 8.507059e+37
    %v727 = vand.u32 %v86, 2147483648
    %v728 = vor.u32 1.1754944e-38, %v727
    %v729 = vsel %vm726, %v728, %v724
    %v730 = vmul.f32 %v689, %v729
    %vm731 = vweird.f32 %v86
    %v732 = vsel %vm731, %v689, %v730
    %s733 = scalar_lea.vmem [#allocation1], 8
    %734 = vst [vmem:[%s733] sm:$0xff] %v732
    %v735 = vrcp.pop %v115
    %v736 = vmul.f32 %v115, %v735
    %v737 = vsub.f32 1.0, %v736
    %v738 = vmul.f32 %v735, %v737
    %v739 = vadd.f32 %v735, %v738
    %vm740 = vweird.f32 %v115
    %vm741 = vweird.f32 %v735
    %vm742 = vmor %vm740, %vm741
    %v743 = vsel %vm742, %v735, %v739
    %v744 = vand.u32 2147483647, %v115
    %vm745 = vcmp.eq.f32.partialorder %v744, 8.507059e+37
    %v746 = vand.u32 %v115, 2147483648
    %v747 = vor.u32 1.1754944e-38, %v746
    %v748 = vsel %vm745, %v747, %v743
    %v749 = vmul.f32 %v693, %v748
    %vm750 = vweird.f32 %v115
    %v751 = vsel %vm750, %v693, %v749
    %s752 = scalar_lea.vmem [#allocation1], 16
    %753 = vst [vmem:[%s752] sm:$0xff] %v751
    %v754 = vrcp.pop %v144
    %v755 = vmul.f32 %v144, %v754
    %v756 = vsub.f32 1.0, %v755
    %v757 = vmul.f32 %v754, %v756
    %v758 = vadd.f32 %v754, %v757
    %vm759 = vweird.f32 %v144
    %vm760 = vweird.f32 %v754
    %vm761 = vmor %vm759, %vm760
    %v762 = vsel %vm761, %v754, %v758
    %v763 = vand.u32 2147483647, %v144
    %vm764 = vcmp.eq.f32.partialorder %v763, 8.507059e+37
    %v765 = vand.u32 %v144, 2147483648
    %v766 = vor.u32 1.1754944e-38, %v765
    %v767 = vsel %vm764, %v766, %v762
    %v768 = vmul.f32 %v697, %v767
    %vm769 = vweird.f32 %v144
    %v770 = vsel %vm769, %v697, %v768
    %s771 = scalar_lea.vmem [#allocation1], 24
    %772 = vst [vmem:[%s771] sm:$0xff] %v770
    // Predicated region
    $region36: #{custom-call.7} parent=1 // pred_check
      _
    $region37: #{custom-call.7} parent=1 // pred_check_branch
      %774 = sbr.rel (0) target = $region39
    $region38: #{custom-call.7} parent=1 // pred_region
      // Predicated region
      $region40: #{custom-call.7} parent=38 // pred_check
        _
      $region41: #{custom-call.7} parent=38 // pred_check_branch
        %776 = sbr.rel (0) target = $region43
      $region42: #{custom-call.7} parent=38 // pred_region
        // Predicated region
        $region55: #{custom-call.7} parent=42 // pred_check
          _
        $region56: #{custom-call.7} parent=42 // pred_check_branch
          %798 = sbr.rel (0) target = $region58
        $region57: #{custom-call.7} parent=42 // pred_region
          loop: start=0, step=1, limit=1
          $region59: #{custom-call.7} parent=57 // loop_pre_header
            _
          $region60: #{custom-call.7} parent=57 // loop_header
            %s800 = sphi 0, %s804
            %p801 = scmp.ge.s32.totalorder %s800, 1
            %s805 = sphi [#allocation1], [#allocation1]
            %s806 = sphi %s1, %s1
          $region61: #{custom-call.7} parent=57 // loop_header_branch
            %803 = sbr.rel (%p801) target = $region65
          $region62: #{custom-call.7} parent=57 // loop_body
            %v807 = vld [vmem:[%s805] sm:$0xff]
            %808 = vst [vmem:[%s806] sm:$0xff] %v807
            %v809 = vld [vmem:[%s805 + $0x8] sm:$0xff]
            %810 = vst [vmem:[%s806 + $0x8] sm:$0xff] %v809
            %v811 = vld [vmem:[%s805 + $0x10] sm:$0xff]
            %812 = vst [vmem:[%s806 + $0x10] sm:$0xff] %v811
            %v813 = vld [vmem:[%s805 + $0x18] sm:$0xff]
            %814 = vst [vmem:[%s806 + $0x18] sm:$0xff] %v813
          $region63: #{custom-call.7} parent=57 // loop_footer
            %s804 = sadd.s32 1, %s800
          $region64: #{custom-call.7} parent=57 // loop_footer_branch
            %799 = sbr.rel target = $region60
          $region65: #{custom-call.7} parent=57 // loop_exit
            _
        $region58: #{custom-call.7} parent=42 // pred_fallthru
          _
        // Predicated region
        $region66: #{custom-call.7} parent=42 // pred_check
          _
        $region67: #{custom-call.7} parent=42 // pred_check_branch
          %816 = sbr.rel target = $region69
        $region68: #{custom-call.7} parent=42 // pred_region
          _
        $region69: #{custom-call.7} parent=42 // pred_fallthru
          _
      $region43: #{custom-call.7} parent=38 // pred_fallthru
        _
      // Predicated region
      $region44: #{custom-call.7} parent=38 // pred_check
        _
      $region45: #{custom-call.7} parent=38 // pred_check_branch
        %778 = sbr.rel target = $region47
      $region46: #{custom-call.7} parent=38 // pred_region
        %s780 = ssub.s32 256, 1
        loop: start=0, step=1, limit=1
        $region48: #{custom-call.7} parent=46 // loop_pre_header
          _
        $region49: #{custom-call.7} parent=46 // loop_header
          %s782 = sphi 0, %s786
          %p783 = scmp.ge.s32.totalorder %s782, 1
          %s787 = sphi [#allocation1], [#allocation1]
          %s788 = sphi %s1, %s1
        $region50: #{custom-call.7} parent=46 // loop_header_branch
          %785 = sbr.rel (%p783) target = $region54
        $region51: #{custom-call.7} parent=46 // loop_body
          %v789 = vld [vmem:[%s787] sm:%s780]
          %790 = vst [vmem:[%s788] sm:%s780] %v789
          %v791 = vld [vmem:[%s787 + $0x8] sm:%s780]
          %792 = vst [vmem:[%s788 + $0x8] sm:%s780] %v791
          %v793 = vld [vmem:[%s787 + $0x10] sm:%s780]
          %794 = vst [vmem:[%s788 + $0x10] sm:%s780] %v793
          %v795 = vld [vmem:[%s787 + $0x18] sm:%s780]
          %796 = vst [vmem:[%s788 + $0x18] sm:%s780] %v795
        $region52: #{custom-call.7} parent=46 // loop_footer
          %s786 = sadd.s32 1, %s782
        $region53: #{custom-call.7} parent=46 // loop_footer_branch
          %781 = sbr.rel target = $region49
        $region54: #{custom-call.7} parent=46 // loop_exit
          _
      $region47: #{custom-call.7} parent=38 // pred_fallthru
        _
    $region39: #{custom-call.7} parent=1 // pred_fallthru
      _
    %817 = vnop

// kernel: gp_emulator_forward.1
$region0: #{gp_emulator_forward.1}
  #allocation0 [shape = 'u32[]', space=smem, size = 0x4, offset = 0x4, fixed_abs, tag = 'smem constant byte address 0x4 - core index']
  #allocation1 [shape = 'u32[72,128]{1,0:T(1,128)}', space=vmem, size = 0x9000, scoped, tag = 'internal scratch']
  %s0 = inlined_call_operand.vmem [shape: f32[32,4], index: 0, kind: input, shape index: {}]
  %s1 = inlined_call_operand.vmem [shape: f32[1,4], index: 1, kind: input, shape index: {}]
  %s2 = inlined_call_operand.vmem [shape: f32[32,32], index: 2, kind: output, shape index: {0}]
  %s3 = inlined_call_operand.vmem [shape: f32[1,32], index: 3, kind: output, shape index: {1}]
  %4 = xla_tuple %s2, %s3
  %s5 = sld [smem:[#allocation0]]
  $region26: #{gp_emulator_forward.1} parent=0
    _
  %s7 = ssub.s32 1, %s5
  %s8 = scalar_select 0, %s7, %s5
  // Predicated region
  $region2: #{gp_emulator_forward.1} parent=0 // pred_check
    _
  $region3: #{gp_emulator_forward.1} parent=0 // pred_check_branch
    %10 = sbr.rel (0) target = $region5
  $region4: #{gp_emulator_forward.1} parent=0 // pred_region
    _
  $region5: #{gp_emulator_forward.1} parent=0 // pred_fallthru
    _
  // Predicated region
  $region6: #{gp_emulator_forward.1} parent=0 // pred_check
    _
  $region7: #{gp_emulator_forward.1} parent=0 // pred_check_branch
    %12 = sbr.rel (0) target = $region9
  $region8: #{gp_emulator_forward.1} parent=0 // pred_region
    _
  $region9: #{gp_emulator_forward.1} parent=0 // pred_fallthru
    _
  %v13 = vld [vmem:[%s0] sm:$0xff]
  %v14 = vld [vmem:[%s0 + $0x8] sm:$0xff]
  %v15 = vld [vmem:[%s0 + $0x10] sm:$0xff]
  %v16 = vld [vmem:[%s0 + $0x18] sm:$0xff]
  %v17 = vld [vmem:[%s1] sm:$0x1]
  %v18 = vmul.f32 %v13, %v13
  %v19 = vmul.f32 %v14, %v14
  %v20 = vmul.f32 %v15, %v15
  %v21 = vmul.f32 %v16, %v16
  %vm22 = vcmask 31744
  %v23 = vsel %vm22, %v18, 0.0
  %24 = vadd.xlane.f32.xlu0 %v23
  %v25 = vpop.xlane.xlu0 %24
  %v26 = vsel %vm22, %v19, 0.0
  %27 = vadd.xlane.f32.xlu0 %v26
  %v28 = vpop.xlane.xlu0 %27
  %v29 = vsel %vm22, %v20, 0.0
  %30 = vadd.xlane.f32.xlu0 %v29
  %v31 = vpop.xlane.xlu0 %30
  %v32 = vsel %vm22, %v21, 0.0
  %33 = vadd.xlane.f32.xlu0 %v32
  %v34 = vpop.xlane.xlu0 %33
  %v36 = vsel %vm22, %v13, 0
  %v39 = vsel %vm22, %v14, 0
  %v42 = vsel %vm22, %v15, 0
  %v45 = vsel %vm22, %v16, 0
  %47 = vmatpush.xpose.msra.mxu0 0.0
  %48 = vmatpush.xpose.msra.mxu0 0.0
  %49 = vmatpush.xpose.msra.mxu0 0.0
  %50 = vmatpush.xpose.msra.mxu0 0.0
  %51 = vmatpush.xpose.msra.mxu0 0.0
  %52 = vmatpush.xpose.msra.mxu0 0.0
  %53 = vmatpush.xpose.msra.mxu0 0.0
  %54 = vmatpush.xpose.msra.mxu0 0.0
  %55 = vmatpush.xpose.msra.mxu0 0.0
  %56 = vmatpush.xpose.msra.mxu0 0.0
  %57 = vmatpush.xpose.msra.mxu0 0.0
  %58 = vmatpush.xpose.msra.mxu0 0.0
  %59 = vmatpush.xpose.msra.mxu0 %v45
  %60 = vmatpush.xpose.msra.mxu0 %v42
  %61 = vmatpush.xpose.msra.mxu0 %v39
  %62 = vmatpush.xpose.msra.mxu0 %v36
  %63 = vmatmul.f32.gmra.mxu0 %v36
  %v64 = vpop.f32.mrf.mxu0
  %v65 = vadd.f32 0.0, %v64
  %66 = vmatmul.f32.gmra.mxu0 %v39
  %v67 = vpop.f32.mrf.mxu0
  %v68 = vadd.f32 0.0, %v67
  %69 = vmatmul.f32.gmra.mxu0 %v42
  %v70 = vpop.f32.mrf.mxu0
  %v71 = vadd.f32 0.0, %v70
  %72 = vmatmul.f32.gmra.mxu0 %v45
  %v73 = vpop.f32.mrf.mxu0
  %v74 = vadd.f32 0.0, %v73
  %75 = vdwg.mxu0
  %76 = vxpose.xlu0.b32.start [1/16] %v25, 128
  %77 = vxpose.xlu0.b32.cont [2/16] %v28, 128
  %78 = vxpose.xlu0.b32.cont [3/16] %v31, 128
  %79 = vxpose.xlu0.b32.cont [4/16] %v34, 128
  %80 = vxpose.xlu0.b32.cont [5/16] 0.0, 128
  %81 = vxpose.xlu0.b32.cont [6/16] 0.0, 128
  %82 = vxpose.xlu0.b32.cont [7/16] 0.0, 128
  %83 = vxpose.xlu0.b32.cont [8/16] 0.0, 128
  %84 = vxpose.xlu0.b32.cont [9/16] 0.0, 128
  %85 = vxpose.xlu0.b32.cont [10/16] 0.0, 128
  %86 = vxpose.xlu0.b32.cont [11/16] 0.0, 128
  %87 = vxpose.xlu0.b32.cont [12/16] 0.0, 128
  %88 = vxpose.xlu0.b32.cont [13/16] 0.0, 128
  %89 = vxpose.xlu0.b32.cont [14/16] 0.0, 128
  %90 = vxpose.xlu0.b32.cont [15/16] 0.0, 128
  %91 = vxpose.xlu0.b32.end [16/16] 0.0, 128
  %v92 = vpop.trf.xlu0
  %v93 = vpop.trf.xlu0
  %v94 = vpop.trf.xlu0
  %v95 = vpop.trf.xlu0
  %v96 = vpop.trf.xlu0
  %v97 = vpop.trf.xlu0
  %v98 = vpop.trf.xlu0
  %v99 = vpop.trf.xlu0
  %v100 = vpop.trf.xlu0
  %v101 = vpop.trf.xlu0
  %v102 = vpop.trf.xlu0
  %v103 = vpop.trf.xlu0
  %v104 = vpop.trf.xlu0
  %v105 = vpop.trf.xlu0
  %v106 = vpop.trf.xlu0
  %v107 = vpop.trf.xlu0
  %v108 = vperm.slane %v92, 0
  %v109 = vadd.f32 %v25, %v108
  %v110 = vadd.f32 %v28, %v108
  %v111 = vadd.f32 %v31, %v108
  %v112 = vadd.f32 %v34, %v108
  %v113 = vmul.f32 %v65, 2.0
  %v114 = vmul.f32 %v68, 2.0
  %v115 = vmul.f32 %v71, 2.0
  %v116 = vmul.f32 %v74, 2.0
  %v117 = vsub.f32 %v109, %v113
  %v118 = vsub.f32 %v110, %v114
  %v119 = vsub.f32 %v111, %v115
  %v120 = vsub.f32 %v112, %v116
  %v121 = vmax.f32 %v117, 0.0
  %v122 = vmax.f32 %v118, 0.0
  %v123 = vmax.f32 %v119, 0.0
  %v124 = vmax.f32 %v120, 0.0
  %v125 = vsub.f32 0.0, %v121
  %v126 = vsub.f32 0.0, %v122
  %v127 = vsub.f32 0.0, %v123
  %v128 = vsub.f32 0.0, %v124
  %v129 = vmul.f32 %v125, 1.0406845
  %v130 = vmul.f32 %v126, 1.0406845
  %v131 = vmul.f32 %v127, 1.0406845
  %v132 = vmul.f32 %v128, 1.0406845
  %v133 = vmul.f32 %v129, 1.442695
  %v134 = vpow.pop %v133
  %v135 = vmul.f32 %v130, 1.442695
  %v136 = vpow.pop %v135
  %v137 = vmul.f32 %v131, 1.442695
  %v138 = vpow.pop %v137
  %v139 = vmul.f32 %v132, 1.442695
  %v140 = vpow.pop %v139
  %v141 = vmul.f32 %v134, 0.6931472
  %v142 = vmul.f32 %v136, 0.6931472
  %v143 = vmul.f32 %v138, 0.6931472
  %v144 = vmul.f32 %v140, 0.6931472
  %v145 = vlaneseq
  %v146 = vshrl.u32 %v145, 7
  %v147 = vadd.s32 %v146, 8
  %v148 = vadd.s32 %v146, 16
  %v149 = vadd.s32 %v146, 24
  %v150 = vlaneseq
  %v151 = vand.u32 %v150, 127
  %vm152 = vcmp.eq.s32.totalorder %v146, %v151
  %vm153 = vcmp.eq.s32.totalorder %v147, %v151
  %vm154 = vcmp.eq.s32.totalorder %v148, %v151
  %vm155 = vcmp.eq.s32.totalorder %v149, %v151
  %v156 = vsel %vm152, 0.6932472, 0.0
  %v157 = vsel %vm153, 0.6932472, 0.0
  %v158 = vsel %vm154, 0.6932472, 0.0
  %v159 = vsel %vm155, 0.6932472, 0.0
  %v160 = vadd.f32 %v141, %v156
  %v161 = vadd.f32 %v142, %v157
  %v162 = vadd.f32 %v143, %v158
  %v163 = vadd.f32 %v144, %v159
  %vm164 = vcmask 261120
  %165 = vst.msk [vmem:[%s2] sm:$0xff] %vm164, %v160
  %166 = vst.msk [vmem:[%s2 + $0x8] sm:$0xff] %vm164, %v161
  %167 = vst.msk [vmem:[%s2 + $0x10] sm:$0xff] %vm164, %v162
  %168 = vst.msk [vmem:[%s2 + $0x18] sm:$0xff] %vm164, %v163
  %v169 = vmul.f32 %v17, %v17
  %vm170 = vcmask 24576
  %v171 = vsel %vm170, %v169, 0.0
  %172 = vadd.xlane.f32.xlu0 %v171
  %v173 = vpop.xlane.xlu0 %172
  %v175 = vsel %vm22, %v17, 0
  %177 = vmatpush.xpose.msra.mxu0 0.0
  %178 = vmatpush.xpose.msra.mxu0 0.0
  %179 = vmatpush.xpose.msra.mxu0 0.0
  %180 = vmatpush.xpose.msra.mxu0 0.0
  %181 = vmatpush.xpose.msra.mxu0 0.0
  %182 = vmatpush.xpose.msra.mxu0 0.0
  %183 = vmatpush.xpose.msra.mxu0 0.0
  %184 = vmatpush.xpose.msra.mxu0 0.0
  %185 = vmatpush.xpose.msra.mxu0 0.0
  %186 = vmatpush.xpose.msra.mxu0 0.0
  %187 = vmatpush.xpose.msra.mxu0 0.0
  %188 = vmatpush.xpose.msra.mxu0 0.0
  %189 = vmatpush.xpose.msra.mxu0 %v45
  %190 = vmatpush.xpose.msra.mxu0 %v42
  %191 = vmatpush.xpose.msra.mxu0 %v39
  %192 = vmatpush.xpose.msra.mxu0 %v36
  %193 = vmatmul.f32.gmra.mxu0 %v175
  %v194 = vpop.f32.mrf.mxu0
  %v195 = vadd.f32 0.0, %v194
  %196 = vdwg.mxu0
  %v197 = vadd.f32 %v173, %v92
  %v198 = vmul.f32 %v195, 2.0
  %v199 = vsub.f32 %v197, %v198
  %v200 = vmax.f32 %v199, 0.0
  %v201 = vsub.f32 0.0, %v200
  %v202 = vmul.f32 %v201, 1.0406845
  %v203 = vmul.f32 %v202, 1.442695
  %v204 = vpow.pop %v203
  %v205 = vmul.f32 %v204, 0.6931472
  %vm206 = vcmask 253952
  %207 = vst.msk [vmem:[%s3] sm:$0x1] %vm206, %v205
  // Predicated region
  $region10: #{gp_emulator_forward.1} parent=0 // pred_check
    _
  $region11: #{gp_emulator_forward.1} parent=0 // pred_check_branch
    %209 = sbr.rel (0) target = $region13
  $region12: #{gp_emulator_forward.1} parent=0 // pred_region
    _
  $region13: #{gp_emulator_forward.1} parent=0 // pred_fallthru
    _
  // Predicated region
  $region14: #{gp_emulator_forward.1} parent=0 // pred_check
    _
  $region15: #{gp_emulator_forward.1} parent=0 // pred_check_branch
    %211 = sbr.rel (0) target = $region17
  $region16: #{gp_emulator_forward.1} parent=0 // pred_region
    _
  $region17: #{gp_emulator_forward.1} parent=0 // pred_fallthru
    _
  // Predicated region
  $region18: #{gp_emulator_forward.1} parent=0 // pred_check
    _
  $region19: #{gp_emulator_forward.1} parent=0 // pred_check_branch
    %213 = sbr.rel (0) target = $region21
  $region20: #{gp_emulator_forward.1} parent=0 // pred_region
    _
  $region21: #{gp_emulator_forward.1} parent=0 // pred_fallthru
    _
  // Predicated region
  $region22: #{gp_emulator_forward.1} parent=0 // pred_check
    _
  $region23: #{gp_emulator_forward.1} parent=0 // pred_check_branch
    %215 = sbr.rel (0) target = $region25
  $region24: #{gp_emulator_forward.1} parent=0 // pred_region
    _
  $region25: #{gp_emulator_forward.1} parent=0 // pred_fallthru
    _

</llo_original>
